<compile_context>
chip_gen: v6e
topology: v6e:2x2x1
jax: 0.10.0
libtpu: 0.0.40
codegen_flags: <defaults>
</compile_context>

<pallas_src>
from functools import partial

import jax
import jax.numpy as jnp
from jax.experimental import pallas as pl
from jax.experimental.pallas import tpu as pltpu


def _conv_kernel(x_ref, w_ref, b_ref, o_ref, *,
                 cin, cout, k, stride, hout, wout, use_bf16):
    # x_ref: (C_in, Hp, Wp)        padded input for this batch element (batch squeezed)
    # w_ref: (C_out, K*K*C_in)     fused tap-major weight matrix
    # b_ref: (C_out, 1)            bias
    # o_ref: (C_out, H_out*W_out)  lane-dense output slab
    taps = []
    for kh in range(k):
        for kw in range(k):
            if stride == 1:
                p = x_ref[:, pl.ds(kh, hout), pl.ds(kw, wout)]
            else:
                # Strided window load straight from the Ref.  Max index touched is
                # kh + (hout-1)*stride <= (k-1) + (Hp-k) = Hp-1, so always in bounds
                # (fixes the old stride>1 reshape-gather OOB hazard).
                p = x_ref[:, pl.ds(kh, hout, stride=stride),
                          pl.ds(kw, wout, stride=stride)]
            taps.append(p.reshape(cin, hout * wout))

    # im2col operand, row order (kh, kw, cin) to match the fused weight layout.
    patches = jnp.concatenate(taps, axis=0)           # (K*K*C_in, H_out*W_out)
    w = w_ref[...]
    if use_bf16:
        patches = patches.astype(jnp.bfloat16)
        w = w.astype(jnp.bfloat16)

    # Single MXU contraction, f32 accumulation; bias added once.
    acc = jnp.dot(w, patches, preferred_element_type=jnp.float32)
    o_ref[...] = (acc + b_ref[...]).astype(o_ref.dtype)


def conv_layer(x, weight, bias, stride, *, use_bf16=False):
    """ReflectionPad2d(k//2) followed by Conv2d(stride) -- PyTorch semantics.

    x:      (N, C_in, H, W)   float32, NCHW
    weight: (C_out, C_in, K, K)
    bias:   (C_out,)
    """
    n, cin, h, w = x.shape
    cout, _, k, _ = weight.shape
    pad = k // 2

    # Reflection padding (glue, matches torch.nn.ReflectionPad2d).
    x_pad = jnp.pad(x, ((0, 0), (0, 0), (pad, pad), (pad, pad)), mode="reflect")
    hp, wp = h + 2 * pad, w + 2 * pad
    hout = (hp - k) // stride + 1
    wout = (wp - k) // stride + 1

    # (C_out, C_in, K, K) -> (C_out, K, K, C_in) -> (C_out, K*K*C_in)
    # so weight column order is (kh, kw, cin), matching the in-kernel patch stacking.
    w_fused = jnp.transpose(weight, (0, 2, 3, 1)).reshape(cout, k * k * cin)
    b2 = bias.reshape(cout, 1)

    kernel = partial(_conv_kernel, cin=cin, cout=cout, k=k, stride=stride,
                     hout=hout, wout=wout, use_bf16=use_bf16)

    itemsize = jnp.dtype(x.dtype).itemsize
    flops = 2 * n * cout * cin * k * k * hout * wout
    bytes_accessed = (x_pad.size + w_fused.size + b2.size
                      + n * cout * hout * wout) * itemsize

    out = pl.pallas_call(
        kernel,
        out_shape=jax.ShapeDtypeStruct((n, cout, hout * wout), x.dtype),
        grid_spec=pltpu.PrefetchScalarGridSpec(
            num_scalar_prefetch=0,
            grid=(n,),
            in_specs=[
                # Batch dim squeezed; weight/bias blocks are grid-invariant (resident).
                pl.BlockSpec((None, cin, hp, wp), lambda i: (i, 0, 0, 0)),
                pl.BlockSpec((cout, k * k * cin), lambda i: (0, 0)),
                pl.BlockSpec((cout, 1), lambda i: (0, 0)),
            ],
            out_specs=pl.BlockSpec((None, cout, hout * wout), lambda i: (i, 0, 0)),
        ),
        compiler_params=pltpu.CompilerParams(dimension_semantics=("parallel",)),
        cost_estimate=pl.CostEstimate(flops=flops, transcendentals=0,
                                      bytes_accessed=bytes_accessed),
    )(x_pad, w_fused, b2)

    # TODO(synk): for production image sizes (e.g. 128ch x 256x256) add a second
    # "parallel" grid axis over output-row tiles with a (K-1)-row halo (element-indexed
    # input blocks or a manual double-buffered DMA) so one block fits v7x's 64 MiB VMEM;
    # the demo shapes fit comfortably in a single per-batch block.
    return out.reshape(n, cout, hout, wout)


def _reference(x, weight, bias, stride):
    pad = weight.shape[-1] // 2
    x_pad = jnp.pad(x, ((0, 0), (0, 0), (pad, pad), (pad, pad)), mode="reflect")
    y = jax.lax.conv_general_dilated(
        x_pad, weight,
        window_strides=(stride, stride),
        padding="VALID",
        dimension_numbers=("NCHW", "OIHW", "NCHW"),
    )
    return y + bias.reshape(1, -1, 1, 1)


if __name__ == "__main__":
    # Small shapes consistent with ConvLayer(in_channels=4, out_channels=8,
    # kernel_size=3, stride=1) on a (2, 4, 16, 16) input.
    N, CIN, COUT, H, W, K, STRIDE = 2, 4, 8, 16, 16, 3, 1

    key = jax.random.PRNGKey(0)
    kx, kw, kb = jax.random.split(key, 3)
    x = jax.random.normal(kx, (N, CIN, H, W), dtype=jnp.float32)
    weight = jax.random.normal(kw, (COUT, CIN, K, K), dtype=jnp.float32) * 0.1
    bias = jax.random.normal(kb, (COUT,), dtype=jnp.float32) * 0.1

    out = conv_layer(x, weight, bias, STRIDE)
    out = jax.block_until_ready(out)

    ref = jax.block_until_ready(_reference(x, weight, bias, STRIDE))
    assert out.shape == ref.shape, (out.shape, ref.shape)
    assert jnp.allclose(out, ref, atol=1e-4, rtol=1e-4), "mismatch vs reference conv"

    print("KERNEL_OK")
</pallas_src>

<mosaic_0001>
module attributes {stable_mosaic.version = 11 : i64} {
  func.func @_conv_kernel(%arg0: i32, %arg1: memref<1x4x18x18xf32, #tpu.memory_space<vmem>>, %arg2: memref<8x36xf32, #tpu.memory_space<vmem>>, %arg3: memref<8x1xf32, #tpu.memory_space<vmem>>, %arg4: memref<1x8x256xf32, #tpu.memory_space<vmem>>) attributes {dimension_semantics = [#tpu.dimension_semantics<parallel>], iteration_bounds = array<i64: 2>, scalar_prefetch = 0 : i64, scratch_operands = 0 : i64, tpu.core_type = #tpu.core_type<tc>, window_params = [{transform_indices = @transform_0, window_bounds = array<i64: 1, 4, 18, 18>}, {pipeline_mode = #tpu.pipeline_mode<synchronous>, transform_indices = @transform_1, window_bounds = array<i64: 8, 36>}, {pipeline_mode = #tpu.pipeline_mode<synchronous>, transform_indices = @transform_2, window_bounds = array<i64: 8, 1>}, {transform_indices = @transform_3, window_bounds = array<i64: 1, 8, 256>}]} {
    %c0 = arith.constant 0 : index
    %c0_0 = arith.constant 0 : index
    %c0_1 = arith.constant 0 : index
    %c0_2 = arith.constant 0 : index
    %0 = vector.load %arg1[%c0, %c0_0, %c0_1, %c0_2] : memref<1x4x18x18xf32, #tpu.memory_space<vmem>>, vector<1x4x16x16xf32>
    %1 = vector.shape_cast %0 : vector<1x4x16x16xf32> to vector<4x16x16xf32>
    %2 = vector.shape_cast %1 : vector<4x16x16xf32> to vector<4x256xf32>
    %c0_3 = arith.constant 0 : index
    %c0_4 = arith.constant 0 : index
    %c0_5 = arith.constant 0 : index
    %c1 = arith.constant 1 : index
    %3 = vector.load %arg1[%c0_3, %c0_4, %c0_5, %c1] : memref<1x4x18x18xf32, #tpu.memory_space<vmem>>, vector<1x4x16x16xf32>
    %4 = vector.shape_cast %3 : vector<1x4x16x16xf32> to vector<4x16x16xf32>
    %5 = vector.shape_cast %4 : vector<4x16x16xf32> to vector<4x256xf32>
    %c0_6 = arith.constant 0 : index
    %c0_7 = arith.constant 0 : index
    %c0_8 = arith.constant 0 : index
    %c2 = arith.constant 2 : index
    %6 = vector.load %arg1[%c0_6, %c0_7, %c0_8, %c2] : memref<1x4x18x18xf32, #tpu.memory_space<vmem>>, vector<1x4x16x16xf32>
    %7 = vector.shape_cast %6 : vector<1x4x16x16xf32> to vector<4x16x16xf32>
    %8 = vector.shape_cast %7 : vector<4x16x16xf32> to vector<4x256xf32>
    %c0_9 = arith.constant 0 : index
    %c0_10 = arith.constant 0 : index
    %c1_11 = arith.constant 1 : index
    %c0_12 = arith.constant 0 : index
    %9 = vector.load %arg1[%c0_9, %c0_10, %c1_11, %c0_12] : memref<1x4x18x18xf32, #tpu.memory_space<vmem>>, vector<1x4x16x16xf32>
    %10 = vector.shape_cast %9 : vector<1x4x16x16xf32> to vector<4x16x16xf32>
    %11 = vector.shape_cast %10 : vector<4x16x16xf32> to vector<4x256xf32>
    %c0_13 = arith.constant 0 : index
    %c0_14 = arith.constant 0 : index
    %c1_15 = arith.constant 1 : index
    %c1_16 = arith.constant 1 : index
    %12 = vector.load %arg1[%c0_13, %c0_14, %c1_15, %c1_16] : memref<1x4x18x18xf32, #tpu.memory_space<vmem>>, vector<1x4x16x16xf32>
    %13 = vector.shape_cast %12 : vector<1x4x16x16xf32> to vector<4x16x16xf32>
    %14 = vector.shape_cast %13 : vector<4x16x16xf32> to vector<4x256xf32>
    %c0_17 = arith.constant 0 : index
    %c0_18 = arith.constant 0 : index
    %c1_19 = arith.constant 1 : index
    %c2_20 = arith.constant 2 : index
    %15 = vector.load %arg1[%c0_17, %c0_18, %c1_19, %c2_20] : memref<1x4x18x18xf32, #tpu.memory_space<vmem>>, vector<1x4x16x16xf32>
    %16 = vector.shape_cast %15 : vector<1x4x16x16xf32> to vector<4x16x16xf32>
    %17 = vector.shape_cast %16 : vector<4x16x16xf32> to vector<4x256xf32>
    %c0_21 = arith.constant 0 : index
    %c0_22 = arith.constant 0 : index
    %c2_23 = arith.constant 2 : index
    %c0_24 = arith.constant 0 : index
    %18 = vector.load %arg1[%c0_21, %c0_22, %c2_23, %c0_24] : memref<1x4x18x18xf32, #tpu.memory_space<vmem>>, vector<1x4x16x16xf32>
    %19 = vector.shape_cast %18 : vector<1x4x16x16xf32> to vector<4x16x16xf32>
    %20 = vector.shape_cast %19 : vector<4x16x16xf32> to vector<4x256xf32>
    %c0_25 = arith.constant 0 : index
    %c0_26 = arith.constant 0 : index
    %c2_27 = arith.constant 2 : index
    %c1_28 = arith.constant 1 : index
    %21 = vector.load %arg1[%c0_25, %c0_26, %c2_27, %c1_28] : memref<1x4x18x18xf32, #tpu.memory_space<vmem>>, vector<1x4x16x16xf32>
    %22 = vector.shape_cast %21 : vector<1x4x16x16xf32> to vector<4x16x16xf32>
    %23 = vector.shape_cast %22 : vector<4x16x16xf32> to vector<4x256xf32>
    %c0_29 = arith.constant 0 : index
    %c0_30 = arith.constant 0 : index
    %c2_31 = arith.constant 2 : index
    %c2_32 = arith.constant 2 : index
    %24 = vector.load %arg1[%c0_29, %c0_30, %c2_31, %c2_32] : memref<1x4x18x18xf32, #tpu.memory_space<vmem>>, vector<1x4x16x16xf32>
    %25 = vector.shape_cast %24 : vector<1x4x16x16xf32> to vector<4x16x16xf32>
    %26 = vector.shape_cast %25 : vector<4x16x16xf32> to vector<4x256xf32>
    %27 = tpu.concatenate %2, %5, %8, %11, %14, %17, %20, %23, %26 in 0 : vector<4x256xf32>, vector<4x256xf32>, vector<4x256xf32>, vector<4x256xf32>, vector<4x256xf32>, vector<4x256xf32>, vector<4x256xf32>, vector<4x256xf32>, vector<4x256xf32> -> vector<36x256xf32>
    %c0_33 = arith.constant 0 : index
    %c0_34 = arith.constant 0 : index
    %28 = vector.load %arg2[%c0_33, %c0_34] : memref<8x36xf32, #tpu.memory_space<vmem>>, vector<8x36xf32>
    %cst = arith.constant dense<0.000000e+00> : vector<8x256xf32>
    %29 = tpu.matmul %28, %27, %cst {dimension_numbers = #tpu.dot_dimension_numbers<[1], [0], [0], [1], [0, 0, 1, 1], [], []>} : vector<8x36xf32>, vector<36x256xf32>, vector<8x256xf32> -> vector<8x256xf32>
    %c0_35 = arith.constant 0 : index
    %c0_36 = arith.constant 0 : index
    %30 = vector.load %arg3[%c0_35, %c0_36] : memref<8x1xf32, #tpu.memory_space<vmem>>, vector<8x1xf32>
    %31 = vector.broadcast %30 : vector<8x1xf32> to vector<8x256xf32>
    %32 = arith.addf %29, %31 : vector<8x256xf32>
    %c0_37 = arith.constant 0 : index
    %c0_38 = arith.constant 0 : index
    %c0_39 = arith.constant 0 : index
    %33 = vector.load %arg4[%c0_37, %c0_38, %c0_39] : memref<1x8x256xf32, #tpu.memory_space<vmem>>, vector<1x8x256xf32>
    %34 = vector.shape_cast %33 : vector<1x8x256xf32> to vector<8x256xf32>
    %35 = vector.shape_cast %32 : vector<8x256xf32> to vector<1x8x256xf32>
    tpu.vector_store %arg4[%c0_37, %c0_38, %c0_39], %35 {strides = array<i32>} : memref<1x8x256xf32, #tpu.memory_space<vmem>>, vector<1x8x256xf32>,
    return
  }
  func.func @transform_0(%arg0: i32) -> (i32, i32, i32, i32) {
    %c0_i32 = arith.constant 0 : i32
    %c0_i32_0 = arith.constant 0 : i32
    %c0_i32_1 = arith.constant 0 : i32
    %c0_i32_2 = arith.constant 0 : i32
    return %arg0, %c0_i32, %c0_i32_0, %c0_i32_1 : i32, i32, i32, i32
  }
  func.func @transform_1(%arg0: i32) -> (i32, i32) {
    %c0_i32 = arith.constant 0 : i32
    %c0_i32_0 = arith.constant 0 : i32
    %c0_i32_1 = arith.constant 0 : i32
    return %c0_i32, %c0_i32_0 : i32, i32
  }
  func.func @transform_2(%arg0: i32) -> (i32, i32) {
    %c0_i32 = arith.constant 0 : i32
    %c0_i32_0 = arith.constant 0 : i32
    %c0_i32_1 = arith.constant 0 : i32
    return %c0_i32, %c0_i32_0 : i32, i32
  }
  func.func @transform_3(%arg0: i32) -> (i32, i32, i32) {
    %c0_i32 = arith.constant 0 : i32
    %c0_i32_0 = arith.constant 0 : i32
    %c0_i32_1 = arith.constant 0 : i32
    return %arg0, %c0_i32, %c0_i32_0 : i32, i32, i32
  }
}

</mosaic_0001>

<llo_original>
// kernel: tpu_custom_call.1
$region0: #{tpu_custom_call.1}
  #allocation0 [shape = 'u32[]', space=smem, size = 0x4, offset = 0x4, fixed_abs, tag = 'smem constant byte address 0x4 - core index']
  #allocation1 [shape = 'u32[144,128]{1,0:T(1,128)}', space=vmem, size = 0x12000, scoped, tag = 'internal scratch']
  %s0 = inlined_call_operand.vmem [shape: f32[2,4,18,18], index: 0, kind: input, shape index: {}]
  %s1 = inlined_call_operand.vmem [shape: f32[8,36], index: 1, kind: input, shape index: {}]
  %s2 = inlined_call_operand.vmem [shape: f32[8,1], index: 2, kind: input, shape index: {}]
  %s3 = inlined_call_operand.hbm [shape: f32[2,8,256], index: 3, kind: output, shape index: {}]
  %s4 = sld [smem:[#allocation0]]
  $region45: #{tpu_custom_call.1} parent=0
    _
  %s6 = ssub.s32 1, %s4
  %s7 = scalar_select 0, %s6, %s4
  $region1: #{tpu_custom_call.1} parent=0
    #allocation2 [shape = 'u8[16384]{0}', space=vmem, size = 0x4000, scoped, tag = 'output window, operand 0']
    #allocation3 [shape = 's32[2]{0}', space=sflag, size = 0x8, scoped, tag = 'scoped memory for tpu_custom_call.1']
    %8 = vsyncpa [#allocation3], 0
    %s9 = scalar_lea.sflag [#allocation3], 1
    %10 = vsyncpa %s9, 0
    loop: start=0, step=1, limit=4
    $region2: #{tpu_custom_call.1} parent=1 // loop_pre_header
      _
    $region3: #{tpu_custom_call.1} parent=1 // loop_header
      %s12 = sphi 0, %s16
      %p13 = scmp.ge.s32.totalorder %s12, 4
      %s22 = sphi 0, %s24
      %s25 = sphi 0, %s22
      %s26 = sphi 0, %s25
      %s42 = sphi 0, %s26
      %s46 = sphi 0, %s46
      %s48 = sphi 0, %s46
      %s49 = sphi 0, %s48
      %s63 = sphi 0, %s49
      %s67 = sphi 0, %s67
      %s69 = sphi 0, %s67
      %s70 = sphi 0, %s69
      %s84 = sphi 0, %s70
      %s90 = sphi 0, %s92
      %s93 = sphi 0, %s90
      %s94 = sphi 0, %s93
      %s110 = sphi 0, %s94
    $region4: #{tpu_custom_call.1} parent=1 // loop_header_branch
      %15 = sbr.rel (%p13) target = $region8
    $region5: #{tpu_custom_call.1} parent=1 // loop_body
      %s17 = ssub.s32 %s12, 1
      %s18 = ssub.s32 %s12, 2
      %s19 = sadd.s32 %s12, 1
      %s20 = ssub.s32 %s12, %s19
      %p21 = scmp.eq.s32.totalorder %s20, 0
      %s23 = sadd.s32 %s22, 1
      %s24 = scalar_select %p21, %s22, %s23
      %p27 = pneg %p21
      %p28 = scmp.eq.s32.totalorder %s12, 1
      %p29 = por %p27, %p28
      %p30 = scmp.ne.s32.totalorder %s22, %s25
      %p31 = scmp.eq.s32.totalorder %s12, 0
      %p32 = por %p30, %p31
      %p33 = scmp.ne.s32.totalorder %s22, %s25
      %p34 = scmp.eq.s32.totalorder %s17, 1
      %p35 = por %p33, %p34
      %p36 = scmp.ne.s32.totalorder %s25, %s26
      %p37 = scmp.eq.s32.totalorder %s17, 0
      %p38 = por %p36, %p37
      %p39 = scmp.ne.s32.totalorder %s25, %s26
      %p40 = scmp.eq.s32.totalorder %s18, 1
      %p41 = por %p39, %p40
      %p43 = scmp.ne.s32.totalorder %s26, %s42
      %p44 = scmp.eq.s32.totalorder %s18, 0
      %p45 = por %p43, %p44
      %s47 = sadd.s32 %s46, 1
      %p50 = scmp.eq.s32.totalorder %s12, 1
      %p51 = scmp.ne.s32.totalorder %s46, %s48
      %p52 = scmp.eq.s32.totalorder %s12, 0
      %p53 = por %p51, %p52
      %p54 = scmp.ne.s32.totalorder %s46, %s48
      %p55 = scmp.eq.s32.totalorder %s17, 1
      %p56 = por %p54, %p55
      %p57 = scmp.ne.s32.totalorder %s48, %s49
      %p58 = scmp.eq.s32.totalorder %s17, 0
      %p59 = por %p57, %p58
      %p60 = scmp.ne.s32.totalorder %s48, %s49
      %p61 = scmp.eq.s32.totalorder %s18, 1
      %p62 = por %p60, %p61
      %p64 = scmp.ne.s32.totalorder %s49, %s63
      %p65 = scmp.eq.s32.totalorder %s18, 0
      %p66 = por %p64, %p65
      %s68 = sadd.s32 %s67, 1
      %p71 = scmp.eq.s32.totalorder %s12, 1
      %p72 = scmp.ne.s32.totalorder %s67, %s69
      %p73 = scmp.eq.s32.totalorder %s12, 0
      %p74 = por %p72, %p73
      %p75 = scmp.ne.s32.totalorder %s67, %s69
      %p76 = scmp.eq.s32.totalorder %s17, 1
      %p77 = por %p75, %p76
      %p78 = scmp.ne.s32.totalorder %s69, %s70
      %p79 = scmp.eq.s32.totalorder %s17, 0
      %p80 = por %p78, %p79
      %p81 = scmp.ne.s32.totalorder %s69, %s70
      %p82 = scmp.eq.s32.totalorder %s18, 1
      %p83 = por %p81, %p82
      %p85 = scmp.ne.s32.totalorder %s70, %s84
      %p86 = scmp.eq.s32.totalorder %s18, 0
      %p87 = por %p85, %p86
      %s88 = ssub.s32 %s12, %s19
      %p89 = scmp.eq.s32.totalorder %s88, 0
      %s91 = sadd.s32 %s90, 1
      %s92 = scalar_select %p89, %s90, %s91
      %p95 = pneg %p89
      %p96 = scmp.eq.s32.totalorder %s12, 1
      %p97 = por %p95, %p96
      %p98 = scmp.ne.s32.totalorder %s90, %s93
      %p99 = scmp.eq.s32.totalorder %s12, 0
      %p100 = por %p98, %p99
      %p101 = scmp.ne.s32.totalorder %s90, %s93
      %p102 = scmp.eq.s32.totalorder %s17, 1
      %p103 = por %p101, %p102
      %p104 = scmp.ne.s32.totalorder %s93, %s94
      %p105 = scmp.eq.s32.totalorder %s17, 0
      %p106 = por %p104, %p105
      %p107 = scmp.ne.s32.totalorder %s93, %s94
      %p108 = scmp.eq.s32.totalorder %s18, 1
      %p109 = por %p107, %p108
      %p111 = scmp.ne.s32.totalorder %s94, %s110
      %p112 = scmp.eq.s32.totalorder %s18, 0
      %p113 = por %p111, %p112
      %p114 = scmp.le.s32.totalorder 1, %s12
      %p115 = scmp.lt.s32.totalorder %s12, 3
      %p116 = pnand %p114, %p115
      %p117 = pneg %p116
      // Predicated region
      $region9: #{tpu_custom_call.1} parent=5 // pred_check
        _
      $region10: #{tpu_custom_call.1} parent=5 // pred_check_branch
        %119 = sbr.rel (%p116) target = $region12
      $region11: #{tpu_custom_call.1} parent=5 // pred_region
        %s120 = ssub.s32 %s12, 1
        // Predicated region
        $region13: #{tpu_custom_call.1} parent=11 // pred_check
          %p121 = pneg %p59
        $region14: #{tpu_custom_call.1} parent=11 // pred_check_branch
          %123 = sbr.rel (%p121) target = $region16
        $region15: #{tpu_custom_call.1} parent=11 // pred_region
          _
        $region16: #{tpu_custom_call.1} parent=11 // pred_fallthru
          _
        // Predicated region
        $region17: #{tpu_custom_call.1} parent=11 // pred_check
          %p124 = pneg %p80
        $region18: #{tpu_custom_call.1} parent=11 // pred_check_branch
          %126 = sbr.rel (%p124) target = $region20
        $region19: #{tpu_custom_call.1} parent=11 // pred_region
          _
        $region20: #{tpu_custom_call.1} parent=11 // pred_fallthru
          _
      $region12: #{tpu_custom_call.1} parent=5 // pred_fallthru
        _
      %p127 = scmp.lt.s32.totalorder %s12, 2
      // Predicated region
      $region21: #{tpu_custom_call.1} parent=5 // pred_check
        %p128 = pneg %p127
      $region22: #{tpu_custom_call.1} parent=5 // pred_check_branch
        %130 = sbr.rel (%p128) target = $region24
      $region23: #{tpu_custom_call.1} parent=5 // pred_region
        // Predicated region
        $region25: #{tpu_custom_call.1} parent=23 // pred_check
          %p131 = pneg %p32
        $region26: #{tpu_custom_call.1} parent=23 // pred_check_branch
          %133 = sbr.rel (%p131) target = $region28
        $region27: #{tpu_custom_call.1} parent=23 // pred_region
          %p134 = scmp.lt.s32.totalorder %s12, 1
          %s135 = scalar_select %p134, %s12, 1
          %s136 = smul.addr %s135, 12
          %s137 = smul.addr %s136, 8
          %s138 = scalar_lea.vmem %s0, %s137
        $region28: #{tpu_custom_call.1} parent=23 // pred_fallthru
          _
      $region24: #{tpu_custom_call.1} parent=5 // pred_fallthru
        _
      %p139 = scmp.le.s32.totalorder 1, %s12
      %p140 = scmp.lt.s32.totalorder %s12, 3
      %p141 = pnand %p139, %p140
      %p142 = pneg %p141
      // Predicated region
      $region29: #{tpu_custom_call.1} parent=5 // pred_check
        _
      $region30: #{tpu_custom_call.1} parent=5 // pred_check_branch
        %144 = sbr.rel (%p141) target = $region32
      $region31: #{tpu_custom_call.1} parent=5 // pred_region
        %s145 = ssub.s32 %s12, 1
        %p146 = scmp.lt.s32.totalorder %s17, 1
        %s147 = scalar_select %p146, %s17, 1
        %s148 = smul.addr %s147, 12
        %s149 = smul.addr %s148, 8
        %s150 = scalar_lea.vmem %s0, %s149
        %p151 = pneg %p38
        %p152 = pneg %p35
        %p153 = pneg %p59
        %p154 = pneg %p56
        %p155 = pneg %p80
        %p156 = pneg %p77
        %p157 = pneg %p106
        %p158 = pneg %p103
        %s159 = sand.u32 %s93, 1
        %s160 = scalar_lea.sflag [#allocation3], %s159
        %s161 = sand.u32 %s93, 1
        %s162 = smul.addr %s161, 16
        %s163 = scalar_lea.vmem [#allocation2], %s162
        %p164 = scmp.lt.s32.totalorder %s17, 1
        %s165 = scalar_select %p164, %s17, 1
        %s166 = smul.addr %s165, 12
        %s167 = smul.addr %s166, 8
        %s168 = scalar_lea.vmem %s0, %s167
        %v169 = vld [vmem:[%s168] sm:$0xff]
        %v170 = vld [vmem:[%s168 + $0x8] sm:$0xff]
        %v171 = vld [vmem:[%s168 + $0x18] sm:$0xff]
        %v172 = vld [vmem:[%s168 + $0x20] sm:$0xff]
        %v173 = vld [vmem:[%s168 + $0x30] sm:$0xff]
        %v174 = vld [vmem:[%s168 + $0x38] sm:$0xff]
        %v175 = vld [vmem:[%s168 + $0x48] sm:$0xff]
        %v176 = vld [vmem:[%s168 + $0x50] sm:$0xff]
        %v177 = vcombine.low %v169, %v173
        %v178 = vcombine.high %v169, %v173
        %v180 = vunpack.c.l.s4 1983009808
        %v181 = vunpack.c.0.s8 %v180
        %v182 = vlaneseq
        %v183 = vshrl.u32 %v182, 7
        %v184 = vsub.s32 %v181, %v183
        %v185 = vrot.slane %v177, %v184
        %v187 = vunpack.c.l.s4 1983009808
        %v188 = vunpack.c.0.s8 %v187
        %v189 = vlaneseq
        %v190 = vshrl.u32 %v189, 7
        %v191 = vsub.s32 %v188, %v190
        %v192 = vrot.slane %v178, %v191
        %v193 = vcombine.low %v171, %v175
        %v194 = vcombine.high %v171, %v175
        %v196 = vunpack.c.l.s4 1983009808
        %v197 = vunpack.c.0.s8 %v196
        %v198 = vlaneseq
        %v199 = vshrl.u32 %v198, 7
        %v200 = vsub.s32 %v197, %v199
        %v201 = vrot.slane %v193, %v200
        %v203 = vunpack.c.l.s4 1983009808
        %v204 = vunpack.c.0.s8 %v203
        %v205 = vlaneseq
        %v206 = vshrl.u32 %v205, 7
        %v207 = vsub.s32 %v204, %v206
        %v208 = vrot.slane %v194, %v207
        %v209 = vcombine.low %v185, %v201
        %v210 = vcombine.high %v185, %v201
        %v212 = vunpack.c.l.s4 1934713408
        %v213 = vunpack.c.0.s8 %v212
        %v214 = vlaneseq
        %v215 = vshrl.u32 %v214, 7
        %v216 = vsub.s32 %v213, %v215
        %v217 = vrot.slane %v209, %v216
        %v219 = vunpack.c.l.s4 1934713408
        %v220 = vunpack.c.0.s8 %v219
        %v221 = vlaneseq
        %v222 = vshrl.u32 %v221, 7
        %v223 = vsub.s32 %v220, %v222
        %v224 = vrot.slane %v210, %v223
        %v225 = vcombine.low %v192, %v208
        %v226 = vcombine.high %v192, %v208
        %v228 = vunpack.c.l.s4 1934713408
        %v229 = vunpack.c.0.s8 %v228
        %v230 = vlaneseq
        %v231 = vshrl.u32 %v230, 7
        %v232 = vsub.s32 %v229, %v231
        %v233 = vrot.slane %v225, %v232
        %v235 = vunpack.c.l.s4 1934713408
        %v236 = vunpack.c.0.s8 %v235
        %v237 = vlaneseq
        %v238 = vshrl.u32 %v237, 7
        %v239 = vsub.s32 %v236, %v238
        %v240 = vrot.slane %v226, %v239
        %v241 = vcombine.high %v217, 0.0
        %v242 = vcombine.high %v224, 0.0
        %v243 = vcombine.high %v233, 0.0
        %v244 = vcombine.high %v240, 0.0
        %v245 = vcombine.low %v170, %v174
        %v246 = vcombine.high %v170, %v174
        %v248 = vunpack.c.l.s4 1983009808
        %v249 = vunpack.c.0.s8 %v248
        %v250 = vlaneseq
        %v251 = vshrl.u32 %v250, 7
        %v252 = vsub.s32 %v249, %v251
        %v253 = vrot.slane %v245, %v252
        %v255 = vunpack.c.l.s4 1983009808
        %v256 = vunpack.c.0.s8 %v255
        %v257 = vlaneseq
        %v258 = vshrl.u32 %v257, 7
        %v259 = vsub.s32 %v256, %v258
        %v260 = vrot.slane %v246, %v259
        %v261 = vcombine.low %v172, %v176
        %v262 = vcombine.high %v172, %v176
        %v264 = vunpack.c.l.s4 1983009808
        %v265 = vunpack.c.0.s8 %v264
        %v266 = vlaneseq
        %v267 = vshrl.u32 %v266, 7
        %v268 = vsub.s32 %v265, %v267
        %v269 = vrot.slane %v261, %v268
        %v271 = vunpack.c.l.s4 1983009808
        %v272 = vunpack.c.0.s8 %v271
        %v273 = vlaneseq
        %v274 = vshrl.u32 %v273, 7
        %v275 = vsub.s32 %v272, %v274
        %v276 = vrot.slane %v262, %v275
        %v277 = vcombine.low %v253, %v269
        %v278 = vcombine.high %v253, %v269
        %v280 = vunpack.c.l.s4 1934713408
        %v281 = vunpack.c.0.s8 %v280
        %v282 = vlaneseq
        %v283 = vshrl.u32 %v282, 7
        %v284 = vsub.s32 %v281, %v283
        %v285 = vrot.slane %v277, %v284
        %v287 = vunpack.c.l.s4 1934713408
        %v288 = vunpack.c.0.s8 %v287
        %v289 = vlaneseq
        %v290 = vshrl.u32 %v289, 7
        %v291 = vsub.s32 %v288, %v290
        %v292 = vrot.slane %v278, %v291
        %v293 = vcombine.low %v260, %v276
        %v294 = vcombine.high %v260, %v276
        %v296 = vunpack.c.l.s4 1934713408
        %v297 = vunpack.c.0.s8 %v296
        %v298 = vlaneseq
        %v299 = vshrl.u32 %v298, 7
        %v300 = vsub.s32 %v297, %v299
        %v301 = vrot.slane %v293, %v300
        %v303 = vunpack.c.l.s4 1934713408
        %v304 = vunpack.c.0.s8 %v303
        %v305 = vlaneseq
        %v306 = vshrl.u32 %v305, 7
        %v307 = vsub.s32 %v304, %v306
        %v308 = vrot.slane %v294, %v307
        %v309 = vcombine.high %v285, 0.0
        %v310 = vcombine.high %v292, 0.0
        %v311 = vcombine.high %v301, 0.0
        %v312 = vcombine.high %v308, 0.0
        %314 = vrot.lane.b32.xlu0 %v241, 16
        %v315 = vpop.permute.xlu0 %314
        %318 = vrot.lane.b32.xlu0 %v224, 32
        %v319 = vpop.permute.xlu0 %318
        %322 = vrot.lane.b32.xlu0 %v242, 48
        %v323 = vpop.permute.xlu0 %322
        %326 = vrot.lane.b32.xlu0 %v233, 64
        %v327 = vpop.permute.xlu0 %326
        %330 = vrot.lane.b32.xlu0 %v243, 80
        %v331 = vpop.permute.xlu0 %330
        %334 = vrot.lane.b32.xlu0 %v240, 96
        %v335 = vpop.permute.xlu0 %334
        %338 = vrot.lane.b32.xlu0 %v244, 112
        %v339 = vpop.permute.xlu0 %338
        %342 = vrot.lane.b32.xlu0 %v309, 16
        %v343 = vpop.permute.xlu0 %342
        %346 = vrot.lane.b32.xlu0 %v292, 32
        %v347 = vpop.permute.xlu0 %346
        %350 = vrot.lane.b32.xlu0 %v310, 48
        %v351 = vpop.permute.xlu0 %350
        %354 = vrot.lane.b32.xlu0 %v301, 64
        %v355 = vpop.permute.xlu0 %354
        %358 = vrot.lane.b32.xlu0 %v311, 80
        %v359 = vpop.permute.xlu0 %358
        %362 = vrot.lane.b32.xlu0 %v308, 96
        %v363 = vpop.permute.xlu0 %362
        %366 = vrot.lane.b32.xlu0 %v312, 112
        %v367 = vpop.permute.xlu0 %366
        %vm369 = vcmask 130048
        %v370 = vsel %vm369, %v217, %v315
        %vm371 = vcmask 261120
        %v372 = vsel %vm371, %v370, %v319
        %vm373 = vcmask 392192
        %v374 = vsel %vm373, %v372, %v323
        %vm375 = vcmask 523264
        %v376 = vsel %vm375, %v374, %v327
        %vm377 = vcmask 654336
        %v378 = vsel %vm377, %v376, %v331
        %vm379 = vcmask 785408
        %v380 = vsel %vm379, %v378, %v335
        %vm381 = vcmask 916480
        %v382 = vsel %vm381, %v380, %v339
        %v383 = vsel %vm369, %v285, %v343
        %v384 = vsel %vm371, %v383, %v347
        %v385 = vsel %vm373, %v384, %v351
        %v386 = vsel %vm375, %v385, %v355
        %v387 = vsel %vm377, %v386, %v359
        %v388 = vsel %vm379, %v387, %v363
        %v389 = vsel %vm381, %v388, %v367
        %398 = vrot.lane.b32.xlu0 %v169, 127
        %v399 = vpop.permute.xlu0 %398
        %400 = vrot.lane.b32.xlu0 %v170, 127
        %v401 = vpop.permute.xlu0 %400
        %402 = vrot.lane.b32.xlu0 %v171, 127
        %v403 = vpop.permute.xlu0 %402
        %404 = vrot.lane.b32.xlu0 %v172, 127
        %v405 = vpop.permute.xlu0 %404
        %406 = vrot.lane.b32.xlu0 %v173, 127
        %v407 = vpop.permute.xlu0 %406
        %408 = vrot.lane.b32.xlu0 %v174, 127
        %v409 = vpop.permute.xlu0 %408
        %410 = vrot.lane.b32.xlu0 %v175, 127
        %v411 = vpop.permute.xlu0 %410
        %412 = vrot.lane.b32.xlu0 %v176, 127
        %v413 = vpop.permute.xlu0 %412
        %v422 = vcombine.low %v399, %v407
        %v423 = vcombine.high %v399, %v407
        %v425 = vunpack.c.l.s4 1983009808
        %v426 = vunpack.c.0.s8 %v425
        %v427 = vlaneseq
        %v428 = vshrl.u32 %v427, 7
        %v429 = vsub.s32 %v426, %v428
        %v430 = vrot.slane %v422, %v429
        %v432 = vunpack.c.l.s4 1983009808
        %v433 = vunpack.c.0.s8 %v432
        %v434 = vlaneseq
        %v435 = vshrl.u32 %v434, 7
        %v436 = vsub.s32 %v433, %v435
        %v437 = vrot.slane %v423, %v436
        %v438 = vcombine.low %v403, %v411
        %v439 = vcombine.high %v403, %v411
        %v441 = vunpack.c.l.s4 1983009808
        %v442 = vunpack.c.0.s8 %v441
        %v443 = vlaneseq
        %v444 = vshrl.u32 %v443, 7
        %v445 = vsub.s32 %v442, %v444
        %v446 = vrot.slane %v438, %v445
        %v448 = vunpack.c.l.s4 1983009808
        %v449 = vunpack.c.0.s8 %v448
        %v450 = vlaneseq
        %v451 = vshrl.u32 %v450, 7
        %v452 = vsub.s32 %v449, %v451
        %v453 = vrot.slane %v439, %v452
        %v454 = vcombine.low %v430, %v446
        %v455 = vcombine.high %v430, %v446
        %v457 = vunpack.c.l.s4 1934713408
        %v458 = vunpack.c.0.s8 %v457
        %v459 = vlaneseq
        %v460 = vshrl.u32 %v459, 7
        %v461 = vsub.s32 %v458, %v460
        %v462 = vrot.slane %v454, %v461
        %v464 = vunpack.c.l.s4 1934713408
        %v465 = vunpack.c.0.s8 %v464
        %v466 = vlaneseq
        %v467 = vshrl.u32 %v466, 7
        %v468 = vsub.s32 %v465, %v467
        %v469 = vrot.slane %v455, %v468
        %v470 = vcombine.low %v437, %v453
        %v471 = vcombine.high %v437, %v453
        %v473 = vunpack.c.l.s4 1934713408
        %v474 = vunpack.c.0.s8 %v473
        %v475 = vlaneseq
        %v476 = vshrl.u32 %v475, 7
        %v477 = vsub.s32 %v474, %v476
        %v478 = vrot.slane %v470, %v477
        %v480 = vunpack.c.l.s4 1934713408
        %v481 = vunpack.c.0.s8 %v480
        %v482 = vlaneseq
        %v483 = vshrl.u32 %v482, 7
        %v484 = vsub.s32 %v481, %v483
        %v485 = vrot.slane %v471, %v484
        %v486 = vcombine.high %v462, 0.0
        %v487 = vcombine.high %v469, 0.0
        %v488 = vcombine.high %v478, 0.0
        %v489 = vcombine.high %v485, 0.0
        %v490 = vcombine.low %v401, %v409
        %v491 = vcombine.high %v401, %v409
        %v493 = vunpack.c.l.s4 1983009808
        %v494 = vunpack.c.0.s8 %v493
        %v495 = vlaneseq
        %v496 = vshrl.u32 %v495, 7
        %v497 = vsub.s32 %v494, %v496
        %v498 = vrot.slane %v490, %v497
        %v500 = vunpack.c.l.s4 1983009808
        %v501 = vunpack.c.0.s8 %v500
        %v502 = vlaneseq
        %v503 = vshrl.u32 %v502, 7
        %v504 = vsub.s32 %v501, %v503
        %v505 = vrot.slane %v491, %v504
        %v506 = vcombine.low %v405, %v413
        %v507 = vcombine.high %v405, %v413
        %v509 = vunpack.c.l.s4 1983009808
        %v510 = vunpack.c.0.s8 %v509
        %v511 = vlaneseq
        %v512 = vshrl.u32 %v511, 7
        %v513 = vsub.s32 %v510, %v512
        %v514 = vrot.slane %v506, %v513
        %v516 = vunpack.c.l.s4 1983009808
        %v517 = vunpack.c.0.s8 %v516
        %v518 = vlaneseq
        %v519 = vshrl.u32 %v518, 7
        %v520 = vsub.s32 %v517, %v519
        %v521 = vrot.slane %v507, %v520
        %v522 = vcombine.low %v498, %v514
        %v523 = vcombine.high %v498, %v514
        %v525 = vunpack.c.l.s4 1934713408
        %v526 = vunpack.c.0.s8 %v525
        %v527 = vlaneseq
        %v528 = vshrl.u32 %v527, 7
        %v529 = vsub.s32 %v526, %v528
        %v530 = vrot.slane %v522, %v529
        %v532 = vunpack.c.l.s4 1934713408
        %v533 = vunpack.c.0.s8 %v532
        %v534 = vlaneseq
        %v535 = vshrl.u32 %v534, 7
        %v536 = vsub.s32 %v533, %v535
        %v537 = vrot.slane %v523, %v536
        %v538 = vcombine.low %v505, %v521
        %v539 = vcombine.high %v505, %v521
        %v541 = vunpack.c.l.s4 1934713408
        %v542 = vunpack.c.0.s8 %v541
        %v543 = vlaneseq
        %v544 = vshrl.u32 %v543, 7
        %v545 = vsub.s32 %v542, %v544
        %v546 = vrot.slane %v538, %v545
        %v548 = vunpack.c.l.s4 1934713408
        %v549 = vunpack.c.0.s8 %v548
        %v550 = vlaneseq
        %v551 = vshrl.u32 %v550, 7
        %v552 = vsub.s32 %v549, %v551
        %v553 = vrot.slane %v539, %v552
        %v554 = vcombine.high %v530, 0.0
        %v555 = vcombine.high %v537, 0.0
        %v556 = vcombine.high %v546, 0.0
        %v557 = vcombine.high %v553, 0.0
        %559 = vrot.lane.b32.xlu0 %v486, 16
        %v560 = vpop.permute.xlu0 %559
        %563 = vrot.lane.b32.xlu0 %v469, 32
        %v564 = vpop.permute.xlu0 %563
        %567 = vrot.lane.b32.xlu0 %v487, 48
        %v568 = vpop.permute.xlu0 %567
        %571 = vrot.lane.b32.xlu0 %v478, 64
        %v572 = vpop.permute.xlu0 %571
        %575 = vrot.lane.b32.xlu0 %v488, 80
        %v576 = vpop.permute.xlu0 %575
        %579 = vrot.lane.b32.xlu0 %v485, 96
        %v580 = vpop.permute.xlu0 %579
        %583 = vrot.lane.b32.xlu0 %v489, 112
        %v584 = vpop.permute.xlu0 %583
        %587 = vrot.lane.b32.xlu0 %v554, 16
        %v588 = vpop.permute.xlu0 %587
        %591 = vrot.lane.b32.xlu0 %v537, 32
        %v592 = vpop.permute.xlu0 %591
        %595 = vrot.lane.b32.xlu0 %v555, 48
        %v596 = vpop.permute.xlu0 %595
        %599 = vrot.lane.b32.xlu0 %v546, 64
        %v600 = vpop.permute.xlu0 %599
        %603 = vrot.lane.b32.xlu0 %v556, 80
        %v604 = vpop.permute.xlu0 %603
        %607 = vrot.lane.b32.xlu0 %v553, 96
        %v608 = vpop.permute.xlu0 %607
        %611 = vrot.lane.b32.xlu0 %v557, 112
        %v612 = vpop.permute.xlu0 %611
        %v614 = vsel %vm369, %v462, %v560
        %v615 = vsel %vm371, %v614, %v564
        %v616 = vsel %vm373, %v615, %v568
        %v617 = vsel %vm375, %v616, %v572
        %v618 = vsel %vm377, %v617, %v576
        %v619 = vsel %vm379, %v618, %v580
        %v620 = vsel %vm381, %v619, %v584
        %v621 = vsel %vm369, %v530, %v588
        %v622 = vsel %vm371, %v621, %v592
        %v623 = vsel %vm373, %v622, %v596
        %v624 = vsel %vm375, %v623, %v600
        %v625 = vsel %vm377, %v624, %v604
        %v626 = vsel %vm379, %v625, %v608
        %v627 = vsel %vm381, %v626, %v612
        %628 = vrot.lane.b32.xlu0 %v169, 126
        %v629 = vpop.permute.xlu0 %628
        %630 = vrot.lane.b32.xlu0 %v170, 126
        %v631 = vpop.permute.xlu0 %630
        %632 = vrot.lane.b32.xlu0 %v171, 126
        %v633 = vpop.permute.xlu0 %632
        %634 = vrot.lane.b32.xlu0 %v172, 126
        %v635 = vpop.permute.xlu0 %634
        %636 = vrot.lane.b32.xlu0 %v173, 126
        %v637 = vpop.permute.xlu0 %636
        %638 = vrot.lane.b32.xlu0 %v174, 126
        %v639 = vpop.permute.xlu0 %638
        %640 = vrot.lane.b32.xlu0 %v175, 126
        %v641 = vpop.permute.xlu0 %640
        %642 = vrot.lane.b32.xlu0 %v176, 126
        %v643 = vpop.permute.xlu0 %642
        %v652 = vcombine.low %v629, %v637
        %v653 = vcombine.high %v629, %v637
        %v655 = vunpack.c.l.s4 1983009808
        %v656 = vunpack.c.0.s8 %v655
        %v657 = vlaneseq
        %v658 = vshrl.u32 %v657, 7
        %v659 = vsub.s32 %v656, %v658
        %v660 = vrot.slane %v652, %v659
        %v662 = vunpack.c.l.s4 1983009808
        %v663 = vunpack.c.0.s8 %v662
        %v664 = vlaneseq
        %v665 = vshrl.u32 %v664, 7
        %v666 = vsub.s32 %v663, %v665
        %v667 = vrot.slane %v653, %v666
        %v668 = vcombine.low %v633, %v641
        %v669 = vcombine.high %v633, %v641
        %v671 = vunpack.c.l.s4 1983009808
        %v672 = vunpack.c.0.s8 %v671
        %v673 = vlaneseq
        %v674 = vshrl.u32 %v673, 7
        %v675 = vsub.s32 %v672, %v674
        %v676 = vrot.slane %v668, %v675
        %v678 = vunpack.c.l.s4 1983009808
        %v679 = vunpack.c.0.s8 %v678
        %v680 = vlaneseq
        %v681 = vshrl.u32 %v680, 7
        %v682 = vsub.s32 %v679, %v681
        %v683 = vrot.slane %v669, %v682
        %v684 = vcombine.low %v660, %v676
        %v685 = vcombine.high %v660, %v676
        %v687 = vunpack.c.l.s4 1934713408
        %v688 = vunpack.c.0.s8 %v687
        %v689 = vlaneseq
        %v690 = vshrl.u32 %v689, 7
        %v691 = vsub.s32 %v688, %v690
        %v692 = vrot.slane %v684, %v691
        %v694 = vunpack.c.l.s4 1934713408
        %v695 = vunpack.c.0.s8 %v694
        %v696 = vlaneseq
        %v697 = vshrl.u32 %v696, 7
        %v698 = vsub.s32 %v695, %v697
        %v699 = vrot.slane %v685, %v698
        %v700 = vcombine.low %v667, %v683
        %v701 = vcombine.high %v667, %v683
        %v703 = vunpack.c.l.s4 1934713408
        %v704 = vunpack.c.0.s8 %v703
        %v705 = vlaneseq
        %v706 = vshrl.u32 %v705, 7
        %v707 = vsub.s32 %v704, %v706
        %v708 = vrot.slane %v700, %v707
        %v710 = vunpack.c.l.s4 1934713408
        %v711 = vunpack.c.0.s8 %v710
        %v712 = vlaneseq
        %v713 = vshrl.u32 %v712, 7
        %v714 = vsub.s32 %v711, %v713
        %v715 = vrot.slane %v701, %v714
        %v716 = vcombine.high %v692, 0.0
        %v717 = vcombine.high %v699, 0.0
        %v718 = vcombine.high %v708, 0.0
        %v719 = vcombine.high %v715, 0.0
        %v720 = vcombine.low %v631, %v639
        %v721 = vcombine.high %v631, %v639
        %v723 = vunpack.c.l.s4 1983009808
        %v724 = vunpack.c.0.s8 %v723
        %v725 = vlaneseq
        %v726 = vshrl.u32 %v725, 7
        %v727 = vsub.s32 %v724, %v726
        %v728 = vrot.slane %v720, %v727
        %v730 = vunpack.c.l.s4 1983009808
        %v731 = vunpack.c.0.s8 %v730
        %v732 = vlaneseq
        %v733 = vshrl.u32 %v732, 7
        %v734 = vsub.s32 %v731, %v733
        %v735 = vrot.slane %v721, %v734
        %v736 = vcombine.low %v635, %v643
        %v737 = vcombine.high %v635, %v643
        %v739 = vunpack.c.l.s4 1983009808
        %v740 = vunpack.c.0.s8 %v739
        %v741 = vlaneseq
        %v742 = vshrl.u32 %v741, 7
        %v743 = vsub.s32 %v740, %v742
        %v744 = vrot.slane %v736, %v743
        %v746 = vunpack.c.l.s4 1983009808
        %v747 = vunpack.c.0.s8 %v746
        %v748 = vlaneseq
        %v749 = vshrl.u32 %v748, 7
        %v750 = vsub.s32 %v747, %v749
        %v751 = vrot.slane %v737, %v750
        %v752 = vcombine.low %v728, %v744
        %v753 = vcombine.high %v728, %v744
        %v755 = vunpack.c.l.s4 1934713408
        %v756 = vunpack.c.0.s8 %v755
        %v757 = vlaneseq
        %v758 = vshrl.u32 %v757, 7
        %v759 = vsub.s32 %v756, %v758
        %v760 = vrot.slane %v752, %v759
        %v762 = vunpack.c.l.s4 1934713408
        %v763 = vunpack.c.0.s8 %v762
        %v764 = vlaneseq
        %v765 = vshrl.u32 %v764, 7
        %v766 = vsub.s32 %v763, %v765
        %v767 = vrot.slane %v753, %v766
        %v768 = vcombine.low %v735, %v751
        %v769 = vcombine.high %v735, %v751
        %v771 = vunpack.c.l.s4 1934713408
        %v772 = vunpack.c.0.s8 %v771
        %v773 = vlaneseq
        %v774 = vshrl.u32 %v773, 7
        %v775 = vsub.s32 %v772, %v774
        %v776 = vrot.slane %v768, %v775
        %v778 = vunpack.c.l.s4 1934713408
        %v779 = vunpack.c.0.s8 %v778
        %v780 = vlaneseq
        %v781 = vshrl.u32 %v780, 7
        %v782 = vsub.s32 %v779, %v781
        %v783 = vrot.slane %v769, %v782
        %v784 = vcombine.high %v760, 0.0
        %v785 = vcombine.high %v767, 0.0
        %v786 = vcombine.high %v776, 0.0
        %v787 = vcombine.high %v783, 0.0
        %789 = vrot.lane.b32.xlu0 %v716, 16
        %v790 = vpop.permute.xlu0 %789
        %793 = vrot.lane.b32.xlu0 %v699, 32
        %v794 = vpop.permute.xlu0 %793
        %797 = vrot.lane.b32.xlu0 %v717, 48
        %v798 = vpop.permute.xlu0 %797
        %801 = vrot.lane.b32.xlu0 %v708, 64
        %v802 = vpop.permute.xlu0 %801
        %805 = vrot.lane.b32.xlu0 %v718, 80
        %v806 = vpop.permute.xlu0 %805
        %809 = vrot.lane.b32.xlu0 %v715, 96
        %v810 = vpop.permute.xlu0 %809
        %813 = vrot.lane.b32.xlu0 %v719, 112
        %v814 = vpop.permute.xlu0 %813
        %817 = vrot.lane.b32.xlu0 %v784, 16
        %v818 = vpop.permute.xlu0 %817
        %821 = vrot.lane.b32.xlu0 %v767, 32
        %v822 = vpop.permute.xlu0 %821
        %825 = vrot.lane.b32.xlu0 %v785, 48
        %v826 = vpop.permute.xlu0 %825
        %829 = vrot.lane.b32.xlu0 %v776, 64
        %v830 = vpop.permute.xlu0 %829
        %833 = vrot.lane.b32.xlu0 %v786, 80
        %v834 = vpop.permute.xlu0 %833
        %837 = vrot.lane.b32.xlu0 %v783, 96
        %v838 = vpop.permute.xlu0 %837
        %841 = vrot.lane.b32.xlu0 %v787, 112
        %v842 = vpop.permute.xlu0 %841
        %v844 = vsel %vm369, %v692, %v790
        %v845 = vsel %vm371, %v844, %v794
        %v846 = vsel %vm373, %v845, %v798
        %v847 = vsel %vm375, %v846, %v802
        %v848 = vsel %vm377, %v847, %v806
        %v849 = vsel %vm379, %v848, %v810
        %v850 = vsel %vm381, %v849, %v814
        %v851 = vsel %vm369, %v760, %v818
        %v852 = vsel %vm371, %v851, %v822
        %v853 = vsel %vm373, %v852, %v826
        %v854 = vsel %vm375, %v853, %v830
        %v855 = vsel %vm377, %v854, %v834
        %v856 = vsel %vm379, %v855, %v838
        %v857 = vsel %vm381, %v856, %v842
        %v858 = vld [vmem:[%s168 + $0x1] sm:$0xff]
        %v859 = vld [vmem:[%s168 + $0x9] sm:$0xff]
        %v860 = vld [vmem:[%s168 + $0x19] sm:$0xff]
        %v861 = vld [vmem:[%s168 + $0x21] sm:$0xff]
        %v862 = vld [vmem:[%s168 + $0x31] sm:$0xff]
        %v863 = vld [vmem:[%s168 + $0x39] sm:$0xff]
        %v864 = vld [vmem:[%s168 + $0x49] sm:$0xff]
        %v865 = vld [vmem:[%s168 + $0x51] sm:$0xff]
        %v866 = vcombine.low %v858, %v862
        %v867 = vcombine.high %v858, %v862
        %v869 = vunpack.c.l.s4 1983009808
        %v870 = vunpack.c.0.s8 %v869
        %v871 = vlaneseq
        %v872 = vshrl.u32 %v871, 7
        %v873 = vsub.s32 %v870, %v872
        %v874 = vrot.slane %v866, %v873
        %v876 = vunpack.c.l.s4 1983009808
        %v877 = vunpack.c.0.s8 %v876
        %v878 = vlaneseq
        %v879 = vshrl.u32 %v878, 7
        %v880 = vsub.s32 %v877, %v879
        %v881 = vrot.slane %v867, %v880
        %v882 = vcombine.low %v860, %v864
        %v883 = vcombine.high %v860, %v864
        %v885 = vunpack.c.l.s4 1983009808
        %v886 = vunpack.c.0.s8 %v885
        %v887 = vlaneseq
        %v888 = vshrl.u32 %v887, 7
        %v889 = vsub.s32 %v886, %v888
        %v890 = vrot.slane %v882, %v889
        %v892 = vunpack.c.l.s4 1983009808
        %v893 = vunpack.c.0.s8 %v892
        %v894 = vlaneseq
        %v895 = vshrl.u32 %v894, 7
        %v896 = vsub.s32 %v893, %v895
        %v897 = vrot.slane %v883, %v896
        %v898 = vcombine.low %v874, %v890
        %v899 = vcombine.high %v874, %v890
        %v901 = vunpack.c.l.s4 1934713408
        %v902 = vunpack.c.0.s8 %v901
        %v903 = vlaneseq
        %v904 = vshrl.u32 %v903, 7
        %v905 = vsub.s32 %v902, %v904
        %v906 = vrot.slane %v898, %v905
        %v908 = vunpack.c.l.s4 1934713408
        %v909 = vunpack.c.0.s8 %v908
        %v910 = vlaneseq
        %v911 = vshrl.u32 %v910, 7
        %v912 = vsub.s32 %v909, %v911
        %v913 = vrot.slane %v899, %v912
        %v914 = vcombine.low %v881, %v897
        %v915 = vcombine.high %v881, %v897
        %v917 = vunpack.c.l.s4 1934713408
        %v918 = vunpack.c.0.s8 %v917
        %v919 = vlaneseq
        %v920 = vshrl.u32 %v919, 7
        %v921 = vsub.s32 %v918, %v920
        %v922 = vrot.slane %v914, %v921
        %v924 = vunpack.c.l.s4 1934713408
        %v925 = vunpack.c.0.s8 %v924
        %v926 = vlaneseq
        %v927 = vshrl.u32 %v926, 7
        %v928 = vsub.s32 %v925, %v927
        %v929 = vrot.slane %v915, %v928
        %v930 = vcombine.high %v906, 0.0
        %v931 = vcombine.high %v913, 0.0
        %v932 = vcombine.high %v922, 0.0
        %v933 = vcombine.high %v929, 0.0
        %v934 = vcombine.low %v859, %v863
        %v935 = vcombine.high %v859, %v863
        %v937 = vunpack.c.l.s4 1983009808
        %v938 = vunpack.c.0.s8 %v937
        %v939 = vlaneseq
        %v940 = vshrl.u32 %v939, 7
        %v941 = vsub.s32 %v938, %v940
        %v942 = vrot.slane %v934, %v941
        %v944 = vunpack.c.l.s4 1983009808
        %v945 = vunpack.c.0.s8 %v944
        %v946 = vlaneseq
        %v947 = vshrl.u32 %v946, 7
        %v948 = vsub.s32 %v945, %v947
        %v949 = vrot.slane %v935, %v948
        %v950 = vcombine.low %v861, %v865
        %v951 = vcombine.high %v861, %v865
        %v953 = vunpack.c.l.s4 1983009808
        %v954 = vunpack.c.0.s8 %v953
        %v955 = vlaneseq
        %v956 = vshrl.u32 %v955, 7
        %v957 = vsub.s32 %v954, %v956
        %v958 = vrot.slane %v950, %v957
        %v960 = vunpack.c.l.s4 1983009808
        %v961 = vunpack.c.0.s8 %v960
        %v962 = vlaneseq
        %v963 = vshrl.u32 %v962, 7
        %v964 = vsub.s32 %v961, %v963
        %v965 = vrot.slane %v951, %v964
        %v966 = vcombine.low %v942, %v958
        %v967 = vcombine.high %v942, %v958
        %v969 = vunpack.c.l.s4 1934713408
        %v970 = vunpack.c.0.s8 %v969
        %v971 = vlaneseq
        %v972 = vshrl.u32 %v971, 7
        %v973 = vsub.s32 %v970, %v972
        %v974 = vrot.slane %v966, %v973
        %v976 = vunpack.c.l.s4 1934713408
        %v977 = vunpack.c.0.s8 %v976
        %v978 = vlaneseq
        %v979 = vshrl.u32 %v978, 7
        %v980 = vsub.s32 %v977, %v979
        %v981 = vrot.slane %v967, %v980
        %v982 = vcombine.low %v949, %v965
        %v983 = vcombine.high %v949, %v965
        %v985 = vunpack.c.l.s4 1934713408
        %v986 = vunpack.c.0.s8 %v985
        %v987 = vlaneseq
        %v988 = vshrl.u32 %v987, 7
        %v989 = vsub.s32 %v986, %v988
        %v990 = vrot.slane %v982, %v989
        %v992 = vunpack.c.l.s4 1934713408
        %v993 = vunpack.c.0.s8 %v992
        %v994 = vlaneseq
        %v995 = vshrl.u32 %v994, 7
        %v996 = vsub.s32 %v993, %v995
        %v997 = vrot.slane %v983, %v996
        %v998 = vcombine.high %v974, 0.0
        %v999 = vcombine.high %v981, 0.0
        %v1000 = vcombine.high %v990, 0.0
        %v1001 = vcombine.high %v997, 0.0
        %1003 = vrot.lane.b32.xlu0 %v930, 16
        %v1004 = vpop.permute.xlu0 %1003
        %1007 = vrot.lane.b32.xlu0 %v913, 32
        %v1008 = vpop.permute.xlu0 %1007
        %1011 = vrot.lane.b32.xlu0 %v931, 48
        %v1012 = vpop.permute.xlu0 %1011
        %1015 = vrot.lane.b32.xlu0 %v922, 64
        %v1016 = vpop.permute.xlu0 %1015
        %1019 = vrot.lane.b32.xlu0 %v932, 80
        %v1020 = vpop.permute.xlu0 %1019
        %1023 = vrot.lane.b32.xlu0 %v929, 96
        %v1024 = vpop.permute.xlu0 %1023
        %1027 = vrot.lane.b32.xlu0 %v933, 112
        %v1028 = vpop.permute.xlu0 %1027
        %1031 = vrot.lane.b32.xlu0 %v998, 16
        %v1032 = vpop.permute.xlu0 %1031
        %1035 = vrot.lane.b32.xlu0 %v981, 32
        %v1036 = vpop.permute.xlu0 %1035
        %1039 = vrot.lane.b32.xlu0 %v999, 48
        %v1040 = vpop.permute.xlu0 %1039
        %1043 = vrot.lane.b32.xlu0 %v990, 64
        %v1044 = vpop.permute.xlu0 %1043
        %1047 = vrot.lane.b32.xlu0 %v1000, 80
        %v1048 = vpop.permute.xlu0 %1047
        %1051 = vrot.lane.b32.xlu0 %v997, 96
        %v1052 = vpop.permute.xlu0 %1051
        %1055 = vrot.lane.b32.xlu0 %v1001, 112
        %v1056 = vpop.permute.xlu0 %1055
        %v1058 = vsel %vm369, %v906, %v1004
        %v1059 = vsel %vm371, %v1058, %v1008
        %v1060 = vsel %vm373, %v1059, %v1012
        %v1061 = vsel %vm375, %v1060, %v1016
        %v1062 = vsel %vm377, %v1061, %v1020
        %v1063 = vsel %vm379, %v1062, %v1024
        %v1064 = vsel %vm381, %v1063, %v1028
        %v1065 = vsel %vm369, %v974, %v1032
        %v1066 = vsel %vm371, %v1065, %v1036
        %v1067 = vsel %vm373, %v1066, %v1040
        %v1068 = vsel %vm375, %v1067, %v1044
        %v1069 = vsel %vm377, %v1068, %v1048
        %v1070 = vsel %vm379, %v1069, %v1052
        %v1071 = vsel %vm381, %v1070, %v1056
        %1080 = vrot.lane.b32.xlu0 %v858, 127
        %v1081 = vpop.permute.xlu0 %1080
        %1082 = vrot.lane.b32.xlu0 %v859, 127
        %v1083 = vpop.permute.xlu0 %1082
        %1084 = vrot.lane.b32.xlu0 %v860, 127
        %v1085 = vpop.permute.xlu0 %1084
        %1086 = vrot.lane.b32.xlu0 %v861, 127
        %v1087 = vpop.permute.xlu0 %1086
        %1088 = vrot.lane.b32.xlu0 %v862, 127
        %v1089 = vpop.permute.xlu0 %1088
        %1090 = vrot.lane.b32.xlu0 %v863, 127
        %v1091 = vpop.permute.xlu0 %1090
        %1092 = vrot.lane.b32.xlu0 %v864, 127
        %v1093 = vpop.permute.xlu0 %1092
        %1094 = vrot.lane.b32.xlu0 %v865, 127
        %v1095 = vpop.permute.xlu0 %1094
        %v1104 = vcombine.low %v1081, %v1089
        %v1105 = vcombine.high %v1081, %v1089
        %v1107 = vunpack.c.l.s4 1983009808
        %v1108 = vunpack.c.0.s8 %v1107
        %v1109 = vlaneseq
        %v1110 = vshrl.u32 %v1109, 7
        %v1111 = vsub.s32 %v1108, %v1110
        %v1112 = vrot.slane %v1104, %v1111
        %v1114 = vunpack.c.l.s4 1983009808
        %v1115 = vunpack.c.0.s8 %v1114
        %v1116 = vlaneseq
        %v1117 = vshrl.u32 %v1116, 7
        %v1118 = vsub.s32 %v1115, %v1117
        %v1119 = vrot.slane %v1105, %v1118
        %v1120 = vcombine.low %v1085, %v1093
        %v1121 = vcombine.high %v1085, %v1093
        %v1123 = vunpack.c.l.s4 1983009808
        %v1124 = vunpack.c.0.s8 %v1123
        %v1125 = vlaneseq
        %v1126 = vshrl.u32 %v1125, 7
        %v1127 = vsub.s32 %v1124, %v1126
        %v1128 = vrot.slane %v1120, %v1127
        %v1130 = vunpack.c.l.s4 1983009808
        %v1131 = vunpack.c.0.s8 %v1130
        %v1132 = vlaneseq
        %v1133 = vshrl.u32 %v1132, 7
        %v1134 = vsub.s32 %v1131, %v1133
        %v1135 = vrot.slane %v1121, %v1134
        %v1136 = vcombine.low %v1112, %v1128
        %v1137 = vcombine.high %v1112, %v1128
        %v1139 = vunpack.c.l.s4 1934713408
        %v1140 = vunpack.c.0.s8 %v1139
        %v1141 = vlaneseq
        %v1142 = vshrl.u32 %v1141, 7
        %v1143 = vsub.s32 %v1140, %v1142
        %v1144 = vrot.slane %v1136, %v1143
        %v1146 = vunpack.c.l.s4 1934713408
        %v1147 = vunpack.c.0.s8 %v1146
        %v1148 = vlaneseq
        %v1149 = vshrl.u32 %v1148, 7
        %v1150 = vsub.s32 %v1147, %v1149
        %v1151 = vrot.slane %v1137, %v1150
        %v1152 = vcombine.low %v1119, %v1135
        %v1153 = vcombine.high %v1119, %v1135
        %v1155 = vunpack.c.l.s4 1934713408
        %v1156 = vunpack.c.0.s8 %v1155
        %v1157 = vlaneseq
        %v1158 = vshrl.u32 %v1157, 7
        %v1159 = vsub.s32 %v1156, %v1158
        %v1160 = vrot.slane %v1152, %v1159
        %v1162 = vunpack.c.l.s4 1934713408
        %v1163 = vunpack.c.0.s8 %v1162
        %v1164 = vlaneseq
        %v1165 = vshrl.u32 %v1164, 7
        %v1166 = vsub.s32 %v1163, %v1165
        %v1167 = vrot.slane %v1153, %v1166
        %v1168 = vcombine.high %v1144, 0.0
        %v1169 = vcombine.high %v1151, 0.0
        %v1170 = vcombine.high %v1160, 0.0
        %v1171 = vcombine.high %v1167, 0.0
        %v1172 = vcombine.low %v1083, %v1091
        %v1173 = vcombine.high %v1083, %v1091
        %v1175 = vunpack.c.l.s4 1983009808
        %v1176 = vunpack.c.0.s8 %v1175
        %v1177 = vlaneseq
        %v1178 = vshrl.u32 %v1177, 7
        %v1179 = vsub.s32 %v1176, %v1178
        %v1180 = vrot.slane %v1172, %v1179
        %v1182 = vunpack.c.l.s4 1983009808
        %v1183 = vunpack.c.0.s8 %v1182
        %v1184 = vlaneseq
        %v1185 = vshrl.u32 %v1184, 7
        %v1186 = vsub.s32 %v1183, %v1185
        %v1187 = vrot.slane %v1173, %v1186
        %v1188 = vcombine.low %v1087, %v1095
        %v1189 = vcombine.high %v1087, %v1095
        %v1191 = vunpack.c.l.s4 1983009808
        %v1192 = vunpack.c.0.s8 %v1191
        %v1193 = vlaneseq
        %v1194 = vshrl.u32 %v1193, 7
        %v1195 = vsub.s32 %v1192, %v1194
        %v1196 = vrot.slane %v1188, %v1195
        %v1198 = vunpack.c.l.s4 1983009808
        %v1199 = vunpack.c.0.s8 %v1198
        %v1200 = vlaneseq
        %v1201 = vshrl.u32 %v1200, 7
        %v1202 = vsub.s32 %v1199, %v1201
        %v1203 = vrot.slane %v1189, %v1202
        %v1204 = vcombine.low %v1180, %v1196
        %v1205 = vcombine.high %v1180, %v1196
        %v1207 = vunpack.c.l.s4 1934713408
        %v1208 = vunpack.c.0.s8 %v1207
        %v1209 = vlaneseq
        %v1210 = vshrl.u32 %v1209, 7
        %v1211 = vsub.s32 %v1208, %v1210
        %v1212 = vrot.slane %v1204, %v1211
        %v1214 = vunpack.c.l.s4 1934713408
        %v1215 = vunpack.c.0.s8 %v1214
        %v1216 = vlaneseq
        %v1217 = vshrl.u32 %v1216, 7
        %v1218 = vsub.s32 %v1215, %v1217
        %v1219 = vrot.slane %v1205, %v1218
        %v1220 = vcombine.low %v1187, %v1203
        %v1221 = vcombine.high %v1187, %v1203
        %v1223 = vunpack.c.l.s4 1934713408
        %v1224 = vunpack.c.0.s8 %v1223
        %v1225 = vlaneseq
        %v1226 = vshrl.u32 %v1225, 7
        %v1227 = vsub.s32 %v1224, %v1226
        %v1228 = vrot.slane %v1220, %v1227
        %v1230 = vunpack.c.l.s4 1934713408
        %v1231 = vunpack.c.0.s8 %v1230
        %v1232 = vlaneseq
        %v1233 = vshrl.u32 %v1232, 7
        %v1234 = vsub.s32 %v1231, %v1233
        %v1235 = vrot.slane %v1221, %v1234
        %v1236 = vcombine.high %v1212, 0.0
        %v1237 = vcombine.high %v1219, 0.0
        %v1238 = vcombine.high %v1228, 0.0
        %v1239 = vcombine.high %v1235, 0.0
        %1241 = vrot.lane.b32.xlu0 %v1168, 16
        %v1242 = vpop.permute.xlu0 %1241
        %1245 = vrot.lane.b32.xlu0 %v1151, 32
        %v1246 = vpop.permute.xlu0 %1245
        %1249 = vrot.lane.b32.xlu0 %v1169, 48
        %v1250 = vpop.permute.xlu0 %1249
        %1253 = vrot.lane.b32.xlu0 %v1160, 64
        %v1254 = vpop.permute.xlu0 %1253
        %1257 = vrot.lane.b32.xlu0 %v1170, 80
        %v1258 = vpop.permute.xlu0 %1257
        %1261 = vrot.lane.b32.xlu0 %v1167, 96
        %v1262 = vpop.permute.xlu0 %1261
        %1265 = vrot.lane.b32.xlu0 %v1171, 112
        %v1266 = vpop.permute.xlu0 %1265
        %1269 = vrot.lane.b32.xlu0 %v1236, 16
        %v1270 = vpop.permute.xlu0 %1269
        %1273 = vrot.lane.b32.xlu0 %v1219, 32
        %v1274 = vpop.permute.xlu0 %1273
        %1277 = vrot.lane.b32.xlu0 %v1237, 48
        %v1278 = vpop.permute.xlu0 %1277
        %1281 = vrot.lane.b32.xlu0 %v1228, 64
        %v1282 = vpop.permute.xlu0 %1281
        %1285 = vrot.lane.b32.xlu0 %v1238, 80
        %v1286 = vpop.permute.xlu0 %1285
        %1289 = vrot.lane.b32.xlu0 %v1235, 96
        %v1290 = vpop.permute.xlu0 %1289
        %1293 = vrot.lane.b32.xlu0 %v1239, 112
        %v1294 = vpop.permute.xlu0 %1293
        %v1296 = vsel %vm369, %v1144, %v1242
        %v1297 = vsel %vm371, %v1296, %v1246
        %v1298 = vsel %vm373, %v1297, %v1250
        %v1299 = vsel %vm375, %v1298, %v1254
        %v1300 = vsel %vm377, %v1299, %v1258
        %v1301 = vsel %vm379, %v1300, %v1262
        %v1302 = vsel %vm381, %v1301, %v1266
        %v1303 = vsel %vm369, %v1212, %v1270
        %v1304 = vsel %vm371, %v1303, %v1274
        %v1305 = vsel %vm373, %v1304, %v1278
        %v1306 = vsel %vm375, %v1305, %v1282
        %v1307 = vsel %vm377, %v1306, %v1286
        %v1308 = vsel %vm379, %v1307, %v1290
        %v1309 = vsel %vm381, %v1308, %v1294
        %1310 = vrot.lane.b32.xlu0 %v858, 126
        %v1311 = vpop.permute.xlu0 %1310
        %1312 = vrot.lane.b32.xlu0 %v859, 126
        %v1313 = vpop.permute.xlu0 %1312
        %1314 = vrot.lane.b32.xlu0 %v860, 126
        %v1315 = vpop.permute.xlu0 %1314
        %1316 = vrot.lane.b32.xlu0 %v861, 126
        %v1317 = vpop.permute.xlu0 %1316
        %1318 = vrot.lane.b32.xlu0 %v862, 126
        %v1319 = vpop.permute.xlu0 %1318
        %1320 = vrot.lane.b32.xlu0 %v863, 126
        %v1321 = vpop.permute.xlu0 %1320
        %1322 = vrot.lane.b32.xlu0 %v864, 126
        %v1323 = vpop.permute.xlu0 %1322
        %1324 = vrot.lane.b32.xlu0 %v865, 126
        %v1325 = vpop.permute.xlu0 %1324
        %v1334 = vcombine.low %v1311, %v1319
        %v1335 = vcombine.high %v1311, %v1319
        %v1337 = vunpack.c.l.s4 1983009808
        %v1338 = vunpack.c.0.s8 %v1337
        %v1339 = vlaneseq
        %v1340 = vshrl.u32 %v1339, 7
        %v1341 = vsub.s32 %v1338, %v1340
        %v1342 = vrot.slane %v1334, %v1341
        %v1344 = vunpack.c.l.s4 1983009808
        %v1345 = vunpack.c.0.s8 %v1344
        %v1346 = vlaneseq
        %v1347 = vshrl.u32 %v1346, 7
        %v1348 = vsub.s32 %v1345, %v1347
        %v1349 = vrot.slane %v1335, %v1348
        %v1350 = vcombine.low %v1315, %v1323
        %v1351 = vcombine.high %v1315, %v1323
        %v1353 = vunpack.c.l.s4 1983009808
        %v1354 = vunpack.c.0.s8 %v1353
        %v1355 = vlaneseq
        %v1356 = vshrl.u32 %v1355, 7
        %v1357 = vsub.s32 %v1354, %v1356
        %v1358 = vrot.slane %v1350, %v1357
        %v1360 = vunpack.c.l.s4 1983009808
        %v1361 = vunpack.c.0.s8 %v1360
        %v1362 = vlaneseq
        %v1363 = vshrl.u32 %v1362, 7
        %v1364 = vsub.s32 %v1361, %v1363
        %v1365 = vrot.slane %v1351, %v1364
        %v1366 = vcombine.low %v1342, %v1358
        %v1367 = vcombine.high %v1342, %v1358
        %v1369 = vunpack.c.l.s4 1934713408
        %v1370 = vunpack.c.0.s8 %v1369
        %v1371 = vlaneseq
        %v1372 = vshrl.u32 %v1371, 7
        %v1373 = vsub.s32 %v1370, %v1372
        %v1374 = vrot.slane %v1366, %v1373
        %v1376 = vunpack.c.l.s4 1934713408
        %v1377 = vunpack.c.0.s8 %v1376
        %v1378 = vlaneseq
        %v1379 = vshrl.u32 %v1378, 7
        %v1380 = vsub.s32 %v1377, %v1379
        %v1381 = vrot.slane %v1367, %v1380
        %v1382 = vcombine.low %v1349, %v1365
        %v1383 = vcombine.high %v1349, %v1365
        %v1385 = vunpack.c.l.s4 1934713408
        %v1386 = vunpack.c.0.s8 %v1385
        %v1387 = vlaneseq
        %v1388 = vshrl.u32 %v1387, 7
        %v1389 = vsub.s32 %v1386, %v1388
        %v1390 = vrot.slane %v1382, %v1389
        %v1392 = vunpack.c.l.s4 1934713408
        %v1393 = vunpack.c.0.s8 %v1392
        %v1394 = vlaneseq
        %v1395 = vshrl.u32 %v1394, 7
        %v1396 = vsub.s32 %v1393, %v1395
        %v1397 = vrot.slane %v1383, %v1396
        %v1398 = vcombine.high %v1374, 0.0
        %v1399 = vcombine.high %v1381, 0.0
        %v1400 = vcombine.high %v1390, 0.0
        %v1401 = vcombine.high %v1397, 0.0
        %v1402 = vcombine.low %v1313, %v1321
        %v1403 = vcombine.high %v1313, %v1321
        %v1405 = vunpack.c.l.s4 1983009808
        %v1406 = vunpack.c.0.s8 %v1405
        %v1407 = vlaneseq
        %v1408 = vshrl.u32 %v1407, 7
        %v1409 = vsub.s32 %v1406, %v1408
        %v1410 = vrot.slane %v1402, %v1409
        %v1412 = vunpack.c.l.s4 1983009808
        %v1413 = vunpack.c.0.s8 %v1412
        %v1414 = vlaneseq
        %v1415 = vshrl.u32 %v1414, 7
        %v1416 = vsub.s32 %v1413, %v1415
        %v1417 = vrot.slane %v1403, %v1416
        %v1418 = vcombine.low %v1317, %v1325
        %v1419 = vcombine.high %v1317, %v1325
        %v1421 = vunpack.c.l.s4 1983009808
        %v1422 = vunpack.c.0.s8 %v1421
        %v1423 = vlaneseq
        %v1424 = vshrl.u32 %v1423, 7
        %v1425 = vsub.s32 %v1422, %v1424
        %v1426 = vrot.slane %v1418, %v1425
        %v1428 = vunpack.c.l.s4 1983009808
        %v1429 = vunpack.c.0.s8 %v1428
        %v1430 = vlaneseq
        %v1431 = vshrl.u32 %v1430, 7
        %v1432 = vsub.s32 %v1429, %v1431
        %v1433 = vrot.slane %v1419, %v1432
        %v1434 = vcombine.low %v1410, %v1426
        %v1435 = vcombine.high %v1410, %v1426
        %v1437 = vunpack.c.l.s4 1934713408
        %v1438 = vunpack.c.0.s8 %v1437
        %v1439 = vlaneseq
        %v1440 = vshrl.u32 %v1439, 7
        %v1441 = vsub.s32 %v1438, %v1440
        %v1442 = vrot.slane %v1434, %v1441
        %v1444 = vunpack.c.l.s4 1934713408
        %v1445 = vunpack.c.0.s8 %v1444
        %v1446 = vlaneseq
        %v1447 = vshrl.u32 %v1446, 7
        %v1448 = vsub.s32 %v1445, %v1447
        %v1449 = vrot.slane %v1435, %v1448
        %v1450 = vcombine.low %v1417, %v1433
        %v1451 = vcombine.high %v1417, %v1433
        %v1453 = vunpack.c.l.s4 1934713408
        %v1454 = vunpack.c.0.s8 %v1453
        %v1455 = vlaneseq
        %v1456 = vshrl.u32 %v1455, 7
        %v1457 = vsub.s32 %v1454, %v1456
        %v1458 = vrot.slane %v1450, %v1457
        %v1460 = vunpack.c.l.s4 1934713408
        %v1461 = vunpack.c.0.s8 %v1460
        %v1462 = vlaneseq
        %v1463 = vshrl.u32 %v1462, 7
        %v1464 = vsub.s32 %v1461, %v1463
        %v1465 = vrot.slane %v1451, %v1464
        %v1466 = vcombine.high %v1442, 0.0
        %v1467 = vcombine.high %v1449, 0.0
        %v1468 = vcombine.high %v1458, 0.0
        %v1469 = vcombine.high %v1465, 0.0
        %1471 = vrot.lane.b32.xlu0 %v1398, 16
        %v1472 = vpop.permute.xlu0 %1471
        %1475 = vrot.lane.b32.xlu0 %v1381, 32
        %v1476 = vpop.permute.xlu0 %1475
        %1479 = vrot.lane.b32.xlu0 %v1399, 48
        %v1480 = vpop.permute.xlu0 %1479
        %1483 = vrot.lane.b32.xlu0 %v1390, 64
        %v1484 = vpop.permute.xlu0 %1483
        %1487 = vrot.lane.b32.xlu0 %v1400, 80
        %v1488 = vpop.permute.xlu0 %1487
        %1491 = vrot.lane.b32.xlu0 %v1397, 96
        %v1492 = vpop.permute.xlu0 %1491
        %1495 = vrot.lane.b32.xlu0 %v1401, 112
        %v1496 = vpop.permute.xlu0 %1495
        %1499 = vrot.lane.b32.xlu0 %v1466, 16
        %v1500 = vpop.permute.xlu0 %1499
        %1503 = vrot.lane.b32.xlu0 %v1449, 32
        %v1504 = vpop.permute.xlu0 %1503
        %1507 = vrot.lane.b32.xlu0 %v1467, 48
        %v1508 = vpop.permute.xlu0 %1507
        %1511 = vrot.lane.b32.xlu0 %v1458, 64
        %v1512 = vpop.permute.xlu0 %1511
        %1515 = vrot.lane.b32.xlu0 %v1468, 80
        %v1516 = vpop.permute.xlu0 %1515
        %1519 = vrot.lane.b32.xlu0 %v1465, 96
        %v1520 = vpop.permute.xlu0 %1519
        %1523 = vrot.lane.b32.xlu0 %v1469, 112
        %v1524 = vpop.permute.xlu0 %1523
        %v1526 = vsel %vm369, %v1374, %v1472
        %v1527 = vsel %vm371, %v1526, %v1476
        %v1528 = vsel %vm373, %v1527, %v1480
        %v1529 = vsel %vm375, %v1528, %v1484
        %v1530 = vsel %vm377, %v1529, %v1488
        %v1531 = vsel %vm379, %v1530, %v1492
        %v1532 = vsel %vm381, %v1531, %v1496
        %v1533 = vsel %vm369, %v1442, %v1500
        %v1534 = vsel %vm371, %v1533, %v1504
        %v1535 = vsel %vm373, %v1534, %v1508
        %v1536 = vsel %vm375, %v1535, %v1512
        %v1537 = vsel %vm377, %v1536, %v1516
        %v1538 = vsel %vm379, %v1537, %v1520
        %v1539 = vsel %vm381, %v1538, %v1524
        %v1540 = vld [vmem:[%s168 + $0x2] sm:$0xff]
        %v1541 = vld [vmem:[%s168 + $0xa] sm:$0xff]
        %v1542 = vld [vmem:[%s168 + $0x1a] sm:$0xff]
        %v1543 = vld [vmem:[%s168 + $0x22] sm:$0xff]
        %v1544 = vld [vmem:[%s168 + $0x32] sm:$0xff]
        %v1545 = vld [vmem:[%s168 + $0x3a] sm:$0xff]
        %v1546 = vld [vmem:[%s168 + $0x4a] sm:$0xff]
        %v1547 = vld [vmem:[%s168 + $0x52] sm:$0xff]
        %v1548 = vcombine.low %v1540, %v1544
        %v1549 = vcombine.high %v1540, %v1544
        %v1551 = vunpack.c.l.s4 1983009808
        %v1552 = vunpack.c.0.s8 %v1551
        %v1553 = vlaneseq
        %v1554 = vshrl.u32 %v1553, 7
        %v1555 = vsub.s32 %v1552, %v1554
        %v1556 = vrot.slane %v1548, %v1555
        %v1558 = vunpack.c.l.s4 1983009808
        %v1559 = vunpack.c.0.s8 %v1558
        %v1560 = vlaneseq
        %v1561 = vshrl.u32 %v1560, 7
        %v1562 = vsub.s32 %v1559, %v1561
        %v1563 = vrot.slane %v1549, %v1562
        %v1564 = vcombine.low %v1542, %v1546
        %v1565 = vcombine.high %v1542, %v1546
        %v1567 = vunpack.c.l.s4 1983009808
        %v1568 = vunpack.c.0.s8 %v1567
        %v1569 = vlaneseq
        %v1570 = vshrl.u32 %v1569, 7
        %v1571 = vsub.s32 %v1568, %v1570
        %v1572 = vrot.slane %v1564, %v1571
        %v1574 = vunpack.c.l.s4 1983009808
        %v1575 = vunpack.c.0.s8 %v1574
        %v1576 = vlaneseq
        %v1577 = vshrl.u32 %v1576, 7
        %v1578 = vsub.s32 %v1575, %v1577
        %v1579 = vrot.slane %v1565, %v1578
        %v1580 = vcombine.low %v1556, %v1572
        %v1581 = vcombine.high %v1556, %v1572
        %v1583 = vunpack.c.l.s4 1934713408
        %v1584 = vunpack.c.0.s8 %v1583
        %v1585 = vlaneseq
        %v1586 = vshrl.u32 %v1585, 7
        %v1587 = vsub.s32 %v1584, %v1586
        %v1588 = vrot.slane %v1580, %v1587
        %v1590 = vunpack.c.l.s4 1934713408
        %v1591 = vunpack.c.0.s8 %v1590
        %v1592 = vlaneseq
        %v1593 = vshrl.u32 %v1592, 7
        %v1594 = vsub.s32 %v1591, %v1593
        %v1595 = vrot.slane %v1581, %v1594
        %v1596 = vcombine.low %v1563, %v1579
        %v1597 = vcombine.high %v1563, %v1579
        %v1599 = vunpack.c.l.s4 1934713408
        %v1600 = vunpack.c.0.s8 %v1599
        %v1601 = vlaneseq
        %v1602 = vshrl.u32 %v1601, 7
        %v1603 = vsub.s32 %v1600, %v1602
        %v1604 = vrot.slane %v1596, %v1603
        %v1606 = vunpack.c.l.s4 1934713408
        %v1607 = vunpack.c.0.s8 %v1606
        %v1608 = vlaneseq
        %v1609 = vshrl.u32 %v1608, 7
        %v1610 = vsub.s32 %v1607, %v1609
        %v1611 = vrot.slane %v1597, %v1610
        %v1612 = vcombine.high %v1588, 0.0
        %v1613 = vcombine.high %v1595, 0.0
        %v1614 = vcombine.high %v1604, 0.0
        %v1615 = vcombine.high %v1611, 0.0
        %v1616 = vcombine.low %v1541, %v1545
        %v1617 = vcombine.high %v1541, %v1545
        %v1619 = vunpack.c.l.s4 1983009808
        %v1620 = vunpack.c.0.s8 %v1619
        %v1621 = vlaneseq
        %v1622 = vshrl.u32 %v1621, 7
        %v1623 = vsub.s32 %v1620, %v1622
        %v1624 = vrot.slane %v1616, %v1623
        %v1626 = vunpack.c.l.s4 1983009808
        %v1627 = vunpack.c.0.s8 %v1626
        %v1628 = vlaneseq
        %v1629 = vshrl.u32 %v1628, 7
        %v1630 = vsub.s32 %v1627, %v1629
        %v1631 = vrot.slane %v1617, %v1630
        %v1632 = vcombine.low %v1543, %v1547
        %v1633 = vcombine.high %v1543, %v1547
        %v1635 = vunpack.c.l.s4 1983009808
        %v1636 = vunpack.c.0.s8 %v1635
        %v1637 = vlaneseq
        %v1638 = vshrl.u32 %v1637, 7
        %v1639 = vsub.s32 %v1636, %v1638
        %v1640 = vrot.slane %v1632, %v1639
        %v1642 = vunpack.c.l.s4 1983009808
        %v1643 = vunpack.c.0.s8 %v1642
        %v1644 = vlaneseq
        %v1645 = vshrl.u32 %v1644, 7
        %v1646 = vsub.s32 %v1643, %v1645
        %v1647 = vrot.slane %v1633, %v1646
        %v1648 = vcombine.low %v1624, %v1640
        %v1649 = vcombine.high %v1624, %v1640
        %v1651 = vunpack.c.l.s4 1934713408
        %v1652 = vunpack.c.0.s8 %v1651
        %v1653 = vlaneseq
        %v1654 = vshrl.u32 %v1653, 7
        %v1655 = vsub.s32 %v1652, %v1654
        %v1656 = vrot.slane %v1648, %v1655
        %v1658 = vunpack.c.l.s4 1934713408
        %v1659 = vunpack.c.0.s8 %v1658
        %v1660 = vlaneseq
        %v1661 = vshrl.u32 %v1660, 7
        %v1662 = vsub.s32 %v1659, %v1661
        %v1663 = vrot.slane %v1649, %v1662
        %v1664 = vcombine.low %v1631, %v1647
        %v1665 = vcombine.high %v1631, %v1647
        %v1667 = vunpack.c.l.s4 1934713408
        %v1668 = vunpack.c.0.s8 %v1667
        %v1669 = vlaneseq
        %v1670 = vshrl.u32 %v1669, 7
        %v1671 = vsub.s32 %v1668, %v1670
        %v1672 = vrot.slane %v1664, %v1671
        %v1674 = vunpack.c.l.s4 1934713408
        %v1675 = vunpack.c.0.s8 %v1674
        %v1676 = vlaneseq
        %v1677 = vshrl.u32 %v1676, 7
        %v1678 = vsub.s32 %v1675, %v1677
        %v1679 = vrot.slane %v1665, %v1678
        %v1680 = vcombine.high %v1656, 0.0
        %v1681 = vcombine.high %v1663, 0.0
        %v1682 = vcombine.high %v1672, 0.0
        %v1683 = vcombine.high %v1679, 0.0
        %1685 = vrot.lane.b32.xlu0 %v1612, 16
        %v1686 = vpop.permute.xlu0 %1685
        %1689 = vrot.lane.b32.xlu0 %v1595, 32
        %v1690 = vpop.permute.xlu0 %1689
        %1693 = vrot.lane.b32.xlu0 %v1613, 48
        %v1694 = vpop.permute.xlu0 %1693
        %1697 = vrot.lane.b32.xlu0 %v1604, 64
        %v1698 = vpop.permute.xlu0 %1697
        %1701 = vrot.lane.b32.xlu0 %v1614, 80
        %v1702 = vpop.permute.xlu0 %1701
        %1705 = vrot.lane.b32.xlu0 %v1611, 96
        %v1706 = vpop.permute.xlu0 %1705
        %1709 = vrot.lane.b32.xlu0 %v1615, 112
        %v1710 = vpop.permute.xlu0 %1709
        %1713 = vrot.lane.b32.xlu0 %v1680, 16
        %v1714 = vpop.permute.xlu0 %1713
        %1717 = vrot.lane.b32.xlu0 %v1663, 32
        %v1718 = vpop.permute.xlu0 %1717
        %1721 = vrot.lane.b32.xlu0 %v1681, 48
        %v1722 = vpop.permute.xlu0 %1721
        %1725 = vrot.lane.b32.xlu0 %v1672, 64
        %v1726 = vpop.permute.xlu0 %1725
        %1729 = vrot.lane.b32.xlu0 %v1682, 80
        %v1730 = vpop.permute.xlu0 %1729
        %1733 = vrot.lane.b32.xlu0 %v1679, 96
        %v1734 = vpop.permute.xlu0 %1733
        %1737 = vrot.lane.b32.xlu0 %v1683, 112
        %v1738 = vpop.permute.xlu0 %1737
        %v1740 = vsel %vm369, %v1588, %v1686
        %v1741 = vsel %vm371, %v1740, %v1690
        %v1742 = vsel %vm373, %v1741, %v1694
        %v1743 = vsel %vm375, %v1742, %v1698
        %v1744 = vsel %vm377, %v1743, %v1702
        %v1745 = vsel %vm379, %v1744, %v1706
        %v1746 = vsel %vm381, %v1745, %v1710
        %v1747 = vsel %vm369, %v1656, %v1714
        %v1748 = vsel %vm371, %v1747, %v1718
        %v1749 = vsel %vm373, %v1748, %v1722
        %v1750 = vsel %vm375, %v1749, %v1726
        %v1751 = vsel %vm377, %v1750, %v1730
        %v1752 = vsel %vm379, %v1751, %v1734
        %v1753 = vsel %vm381, %v1752, %v1738
        %1762 = vrot.lane.b32.xlu0 %v1540, 127
        %v1763 = vpop.permute.xlu0 %1762
        %1764 = vrot.lane.b32.xlu0 %v1541, 127
        %v1765 = vpop.permute.xlu0 %1764
        %1766 = vrot.lane.b32.xlu0 %v1542, 127
        %v1767 = vpop.permute.xlu0 %1766
        %1768 = vrot.lane.b32.xlu0 %v1543, 127
        %v1769 = vpop.permute.xlu0 %1768
        %1770 = vrot.lane.b32.xlu0 %v1544, 127
        %v1771 = vpop.permute.xlu0 %1770
        %1772 = vrot.lane.b32.xlu0 %v1545, 127
        %v1773 = vpop.permute.xlu0 %1772
        %1774 = vrot.lane.b32.xlu0 %v1546, 127
        %v1775 = vpop.permute.xlu0 %1774
        %1776 = vrot.lane.b32.xlu0 %v1547, 127
        %v1777 = vpop.permute.xlu0 %1776
        %v1786 = vcombine.low %v1763, %v1771
        %v1787 = vcombine.high %v1763, %v1771
        %v1789 = vunpack.c.l.s4 1983009808
        %v1790 = vunpack.c.0.s8 %v1789
        %v1791 = vlaneseq
        %v1792 = vshrl.u32 %v1791, 7
        %v1793 = vsub.s32 %v1790, %v1792
        %v1794 = vrot.slane %v1786, %v1793
        %v1796 = vunpack.c.l.s4 1983009808
        %v1797 = vunpack.c.0.s8 %v1796
        %v1798 = vlaneseq
        %v1799 = vshrl.u32 %v1798, 7
        %v1800 = vsub.s32 %v1797, %v1799
        %v1801 = vrot.slane %v1787, %v1800
        %v1802 = vcombine.low %v1767, %v1775
        %v1803 = vcombine.high %v1767, %v1775
        %v1805 = vunpack.c.l.s4 1983009808
        %v1806 = vunpack.c.0.s8 %v1805
        %v1807 = vlaneseq
        %v1808 = vshrl.u32 %v1807, 7
        %v1809 = vsub.s32 %v1806, %v1808
        %v1810 = vrot.slane %v1802, %v1809
        %v1812 = vunpack.c.l.s4 1983009808
        %v1813 = vunpack.c.0.s8 %v1812
        %v1814 = vlaneseq
        %v1815 = vshrl.u32 %v1814, 7
        %v1816 = vsub.s32 %v1813, %v1815
        %v1817 = vrot.slane %v1803, %v1816
        %v1818 = vcombine.low %v1794, %v1810
        %v1819 = vcombine.high %v1794, %v1810
        %v1821 = vunpack.c.l.s4 1934713408
        %v1822 = vunpack.c.0.s8 %v1821
        %v1823 = vlaneseq
        %v1824 = vshrl.u32 %v1823, 7
        %v1825 = vsub.s32 %v1822, %v1824
        %v1826 = vrot.slane %v1818, %v1825
        %v1828 = vunpack.c.l.s4 1934713408
        %v1829 = vunpack.c.0.s8 %v1828
        %v1830 = vlaneseq
        %v1831 = vshrl.u32 %v1830, 7
        %v1832 = vsub.s32 %v1829, %v1831
        %v1833 = vrot.slane %v1819, %v1832
        %v1834 = vcombine.low %v1801, %v1817
        %v1835 = vcombine.high %v1801, %v1817
        %v1837 = vunpack.c.l.s4 1934713408
        %v1838 = vunpack.c.0.s8 %v1837
        %v1839 = vlaneseq
        %v1840 = vshrl.u32 %v1839, 7
        %v1841 = vsub.s32 %v1838, %v1840
        %v1842 = vrot.slane %v1834, %v1841
        %v1844 = vunpack.c.l.s4 1934713408
        %v1845 = vunpack.c.0.s8 %v1844
        %v1846 = vlaneseq
        %v1847 = vshrl.u32 %v1846, 7
        %v1848 = vsub.s32 %v1845, %v1847
        %v1849 = vrot.slane %v1835, %v1848
        %v1850 = vcombine.high %v1826, 0.0
        %v1851 = vcombine.high %v1833, 0.0
        %v1852 = vcombine.high %v1842, 0.0
        %v1853 = vcombine.high %v1849, 0.0
        %v1854 = vcombine.low %v1765, %v1773
        %v1855 = vcombine.high %v1765, %v1773
        %v1857 = vunpack.c.l.s4 1983009808
        %v1858 = vunpack.c.0.s8 %v1857
        %v1859 = vlaneseq
        %v1860 = vshrl.u32 %v1859, 7
        %v1861 = vsub.s32 %v1858, %v1860
        %v1862 = vrot.slane %v1854, %v1861
        %v1864 = vunpack.c.l.s4 1983009808
        %v1865 = vunpack.c.0.s8 %v1864
        %v1866 = vlaneseq
        %v1867 = vshrl.u32 %v1866, 7
        %v1868 = vsub.s32 %v1865, %v1867
        %v1869 = vrot.slane %v1855, %v1868
        %v1870 = vcombine.low %v1769, %v1777
        %v1871 = vcombine.high %v1769, %v1777
        %v1873 = vunpack.c.l.s4 1983009808
        %v1874 = vunpack.c.0.s8 %v1873
        %v1875 = vlaneseq
        %v1876 = vshrl.u32 %v1875, 7
        %v1877 = vsub.s32 %v1874, %v1876
        %v1878 = vrot.slane %v1870, %v1877
        %v1880 = vunpack.c.l.s4 1983009808
        %v1881 = vunpack.c.0.s8 %v1880
        %v1882 = vlaneseq
        %v1883 = vshrl.u32 %v1882, 7
        %v1884 = vsub.s32 %v1881, %v1883
        %v1885 = vrot.slane %v1871, %v1884
        %v1886 = vcombine.low %v1862, %v1878
        %v1887 = vcombine.high %v1862, %v1878
        %v1889 = vunpack.c.l.s4 1934713408
        %v1890 = vunpack.c.0.s8 %v1889
        %v1891 = vlaneseq
        %v1892 = vshrl.u32 %v1891, 7
        %v1893 = vsub.s32 %v1890, %v1892
        %v1894 = vrot.slane %v1886, %v1893
        %v1896 = vunpack.c.l.s4 1934713408
        %v1897 = vunpack.c.0.s8 %v1896
        %v1898 = vlaneseq
        %v1899 = vshrl.u32 %v1898, 7
        %v1900 = vsub.s32 %v1897, %v1899
        %v1901 = vrot.slane %v1887, %v1900
        %v1902 = vcombine.low %v1869, %v1885
        %v1903 = vcombine.high %v1869, %v1885
        %v1905 = vunpack.c.l.s4 1934713408
        %v1906 = vunpack.c.0.s8 %v1905
        %v1907 = vlaneseq
        %v1908 = vshrl.u32 %v1907, 7
        %v1909 = vsub.s32 %v1906, %v1908
        %v1910 = vrot.slane %v1902, %v1909
        %v1912 = vunpack.c.l.s4 1934713408
        %v1913 = vunpack.c.0.s8 %v1912
        %v1914 = vlaneseq
        %v1915 = vshrl.u32 %v1914, 7
        %v1916 = vsub.s32 %v1913, %v1915
        %v1917 = vrot.slane %v1903, %v1916
        %v1918 = vcombine.high %v1894, 0.0
        %v1919 = vcombine.high %v1901, 0.0
        %v1920 = vcombine.high %v1910, 0.0
        %v1921 = vcombine.high %v1917, 0.0
        %1923 = vrot.lane.b32.xlu0 %v1850, 16
        %v1924 = vpop.permute.xlu0 %1923
        %1927 = vrot.lane.b32.xlu0 %v1833, 32
        %v1928 = vpop.permute.xlu0 %1927
        %1931 = vrot.lane.b32.xlu0 %v1851, 48
        %v1932 = vpop.permute.xlu0 %1931
        %1935 = vrot.lane.b32.xlu0 %v1842, 64
        %v1936 = vpop.permute.xlu0 %1935
        %1939 = vrot.lane.b32.xlu0 %v1852, 80
        %v1940 = vpop.permute.xlu0 %1939
        %1943 = vrot.lane.b32.xlu0 %v1849, 96
        %v1944 = vpop.permute.xlu0 %1943
        %1947 = vrot.lane.b32.xlu0 %v1853, 112
        %v1948 = vpop.permute.xlu0 %1947
        %1951 = vrot.lane.b32.xlu0 %v1918, 16
        %v1952 = vpop.permute.xlu0 %1951
        %1955 = vrot.lane.b32.xlu0 %v1901, 32
        %v1956 = vpop.permute.xlu0 %1955
        %1959 = vrot.lane.b32.xlu0 %v1919, 48
        %v1960 = vpop.permute.xlu0 %1959
        %1963 = vrot.lane.b32.xlu0 %v1910, 64
        %v1964 = vpop.permute.xlu0 %1963
        %1967 = vrot.lane.b32.xlu0 %v1920, 80
        %v1968 = vpop.permute.xlu0 %1967
        %1971 = vrot.lane.b32.xlu0 %v1917, 96
        %v1972 = vpop.permute.xlu0 %1971
        %1975 = vrot.lane.b32.xlu0 %v1921, 112
        %v1976 = vpop.permute.xlu0 %1975
        %v1978 = vsel %vm369, %v1826, %v1924
        %v1979 = vsel %vm371, %v1978, %v1928
        %v1980 = vsel %vm373, %v1979, %v1932
        %v1981 = vsel %vm375, %v1980, %v1936
        %v1982 = vsel %vm377, %v1981, %v1940
        %v1983 = vsel %vm379, %v1982, %v1944
        %v1984 = vsel %vm381, %v1983, %v1948
        %v1985 = vsel %vm369, %v1894, %v1952
        %v1986 = vsel %vm371, %v1985, %v1956
        %v1987 = vsel %vm373, %v1986, %v1960
        %v1988 = vsel %vm375, %v1987, %v1964
        %v1989 = vsel %vm377, %v1988, %v1968
        %v1990 = vsel %vm379, %v1989, %v1972
        %v1991 = vsel %vm381, %v1990, %v1976
        %1992 = vrot.lane.b32.xlu0 %v1540, 126
        %v1993 = vpop.permute.xlu0 %1992
        %1994 = vrot.lane.b32.xlu0 %v1541, 126
        %v1995 = vpop.permute.xlu0 %1994
        %1996 = vrot.lane.b32.xlu0 %v1542, 126
        %v1997 = vpop.permute.xlu0 %1996
        %1998 = vrot.lane.b32.xlu0 %v1543, 126
        %v1999 = vpop.permute.xlu0 %1998
        %2000 = vrot.lane.b32.xlu0 %v1544, 126
        %v2001 = vpop.permute.xlu0 %2000
        %2002 = vrot.lane.b32.xlu0 %v1545, 126
        %v2003 = vpop.permute.xlu0 %2002
        %2004 = vrot.lane.b32.xlu0 %v1546, 126
        %v2005 = vpop.permute.xlu0 %2004
        %2006 = vrot.lane.b32.xlu0 %v1547, 126
        %v2007 = vpop.permute.xlu0 %2006
        %v2016 = vcombine.low %v1993, %v2001
        %v2017 = vcombine.high %v1993, %v2001
        %v2019 = vunpack.c.l.s4 1983009808
        %v2020 = vunpack.c.0.s8 %v2019
        %v2021 = vlaneseq
        %v2022 = vshrl.u32 %v2021, 7
        %v2023 = vsub.s32 %v2020, %v2022
        %v2024 = vrot.slane %v2016, %v2023
        %v2026 = vunpack.c.l.s4 1983009808
        %v2027 = vunpack.c.0.s8 %v2026
        %v2028 = vlaneseq
        %v2029 = vshrl.u32 %v2028, 7
        %v2030 = vsub.s32 %v2027, %v2029
        %v2031 = vrot.slane %v2017, %v2030
        %v2032 = vcombine.low %v1997, %v2005
        %v2033 = vcombine.high %v1997, %v2005
        %v2035 = vunpack.c.l.s4 1983009808
        %v2036 = vunpack.c.0.s8 %v2035
        %v2037 = vlaneseq
        %v2038 = vshrl.u32 %v2037, 7
        %v2039 = vsub.s32 %v2036, %v2038
        %v2040 = vrot.slane %v2032, %v2039
        %v2042 = vunpack.c.l.s4 1983009808
        %v2043 = vunpack.c.0.s8 %v2042
        %v2044 = vlaneseq
        %v2045 = vshrl.u32 %v2044, 7
        %v2046 = vsub.s32 %v2043, %v2045
        %v2047 = vrot.slane %v2033, %v2046
        %v2048 = vcombine.low %v2024, %v2040
        %v2049 = vcombine.high %v2024, %v2040
        %v2051 = vunpack.c.l.s4 1934713408
        %v2052 = vunpack.c.0.s8 %v2051
        %v2053 = vlaneseq
        %v2054 = vshrl.u32 %v2053, 7
        %v2055 = vsub.s32 %v2052, %v2054
        %v2056 = vrot.slane %v2048, %v2055
        %v2058 = vunpack.c.l.s4 1934713408
        %v2059 = vunpack.c.0.s8 %v2058
        %v2060 = vlaneseq
        %v2061 = vshrl.u32 %v2060, 7
        %v2062 = vsub.s32 %v2059, %v2061
        %v2063 = vrot.slane %v2049, %v2062
        %v2064 = vcombine.low %v2031, %v2047
        %v2065 = vcombine.high %v2031, %v2047
        %v2067 = vunpack.c.l.s4 1934713408
        %v2068 = vunpack.c.0.s8 %v2067
        %v2069 = vlaneseq
        %v2070 = vshrl.u32 %v2069, 7
        %v2071 = vsub.s32 %v2068, %v2070
        %v2072 = vrot.slane %v2064, %v2071
        %v2074 = vunpack.c.l.s4 1934713408
        %v2075 = vunpack.c.0.s8 %v2074
        %v2076 = vlaneseq
        %v2077 = vshrl.u32 %v2076, 7
        %v2078 = vsub.s32 %v2075, %v2077
        %v2079 = vrot.slane %v2065, %v2078
        %v2080 = vcombine.high %v2056, 0.0
        %v2081 = vcombine.high %v2063, 0.0
        %v2082 = vcombine.high %v2072, 0.0
        %v2083 = vcombine.high %v2079, 0.0
        %v2084 = vcombine.low %v1995, %v2003
        %v2085 = vcombine.high %v1995, %v2003
        %v2087 = vunpack.c.l.s4 1983009808
        %v2088 = vunpack.c.0.s8 %v2087
        %v2089 = vlaneseq
        %v2090 = vshrl.u32 %v2089, 7
        %v2091 = vsub.s32 %v2088, %v2090
        %v2092 = vrot.slane %v2084, %v2091
        %v2094 = vunpack.c.l.s4 1983009808
        %v2095 = vunpack.c.0.s8 %v2094
        %v2096 = vlaneseq
        %v2097 = vshrl.u32 %v2096, 7
        %v2098 = vsub.s32 %v2095, %v2097
        %v2099 = vrot.slane %v2085, %v2098
        %v2100 = vcombine.low %v1999, %v2007
        %v2101 = vcombine.high %v1999, %v2007
        %v2103 = vunpack.c.l.s4 1983009808
        %v2104 = vunpack.c.0.s8 %v2103
        %v2105 = vlaneseq
        %v2106 = vshrl.u32 %v2105, 7
        %v2107 = vsub.s32 %v2104, %v2106
        %v2108 = vrot.slane %v2100, %v2107
        %v2110 = vunpack.c.l.s4 1983009808
        %v2111 = vunpack.c.0.s8 %v2110
        %v2112 = vlaneseq
        %v2113 = vshrl.u32 %v2112, 7
        %v2114 = vsub.s32 %v2111, %v2113
        %v2115 = vrot.slane %v2101, %v2114
        %v2116 = vcombine.low %v2092, %v2108
        %v2117 = vcombine.high %v2092, %v2108
        %v2119 = vunpack.c.l.s4 1934713408
        %v2120 = vunpack.c.0.s8 %v2119
        %v2121 = vlaneseq
        %v2122 = vshrl.u32 %v2121, 7
        %v2123 = vsub.s32 %v2120, %v2122
        %v2124 = vrot.slane %v2116, %v2123
        %v2126 = vunpack.c.l.s4 1934713408
        %v2127 = vunpack.c.0.s8 %v2126
        %v2128 = vlaneseq
        %v2129 = vshrl.u32 %v2128, 7
        %v2130 = vsub.s32 %v2127, %v2129
        %v2131 = vrot.slane %v2117, %v2130
        %v2132 = vcombine.low %v2099, %v2115
        %v2133 = vcombine.high %v2099, %v2115
        %v2135 = vunpack.c.l.s4 1934713408
        %v2136 = vunpack.c.0.s8 %v2135
        %v2137 = vlaneseq
        %v2138 = vshrl.u32 %v2137, 7
        %v2139 = vsub.s32 %v2136, %v2138
        %v2140 = vrot.slane %v2132, %v2139
        %v2142 = vunpack.c.l.s4 1934713408
        %v2143 = vunpack.c.0.s8 %v2142
        %v2144 = vlaneseq
        %v2145 = vshrl.u32 %v2144, 7
        %v2146 = vsub.s32 %v2143, %v2145
        %v2147 = vrot.slane %v2133, %v2146
        %v2148 = vcombine.high %v2124, 0.0
        %v2149 = vcombine.high %v2131, 0.0
        %v2150 = vcombine.high %v2140, 0.0
        %v2151 = vcombine.high %v2147, 0.0
        %2153 = vrot.lane.b32.xlu0 %v2080, 16
        %v2154 = vpop.permute.xlu0 %2153
        %2157 = vrot.lane.b32.xlu0 %v2063, 32
        %v2158 = vpop.permute.xlu0 %2157
        %2161 = vrot.lane.b32.xlu0 %v2081, 48
        %v2162 = vpop.permute.xlu0 %2161
        %2165 = vrot.lane.b32.xlu0 %v2072, 64
        %v2166 = vpop.permute.xlu0 %2165
        %2169 = vrot.lane.b32.xlu0 %v2082, 80
        %v2170 = vpop.permute.xlu0 %2169
        %2173 = vrot.lane.b32.xlu0 %v2079, 96
        %v2174 = vpop.permute.xlu0 %2173
        %2177 = vrot.lane.b32.xlu0 %v2083, 112
        %v2178 = vpop.permute.xlu0 %2177
        %2181 = vrot.lane.b32.xlu0 %v2148, 16
        %v2182 = vpop.permute.xlu0 %2181
        %2185 = vrot.lane.b32.xlu0 %v2131, 32
        %v2186 = vpop.permute.xlu0 %2185
        %2189 = vrot.lane.b32.xlu0 %v2149, 48
        %v2190 = vpop.permute.xlu0 %2189
        %2193 = vrot.lane.b32.xlu0 %v2140, 64
        %v2194 = vpop.permute.xlu0 %2193
        %2197 = vrot.lane.b32.xlu0 %v2150, 80
        %v2198 = vpop.permute.xlu0 %2197
        %2201 = vrot.lane.b32.xlu0 %v2147, 96
        %v2202 = vpop.permute.xlu0 %2201
        %2205 = vrot.lane.b32.xlu0 %v2151, 112
        %v2206 = vpop.permute.xlu0 %2205
        %v2208 = vsel %vm369, %v2056, %v2154
        %v2209 = vsel %vm371, %v2208, %v2158
        %v2210 = vsel %vm373, %v2209, %v2162
        %v2211 = vsel %vm375, %v2210, %v2166
        %v2212 = vsel %vm377, %v2211, %v2170
        %v2213 = vsel %vm379, %v2212, %v2174
        %v2214 = vsel %vm381, %v2213, %v2178
        %v2215 = vsel %vm369, %v2124, %v2182
        %v2216 = vsel %vm371, %v2215, %v2186
        %v2217 = vsel %vm373, %v2216, %v2190
        %v2218 = vsel %vm375, %v2217, %v2194
        %v2219 = vsel %vm377, %v2218, %v2198
        %v2220 = vsel %vm379, %v2219, %v2202
        %v2221 = vsel %vm381, %v2220, %v2206
        %v2224 = vrot.slane %v620, 4
        %v2225 = vrot.slane %v627, 4
        %v2230 = vrot.slane %v1064, 4
        %v2231 = vrot.slane %v1071, 4
        %v2236 = vrot.slane %v1532, 4
        %v2237 = vrot.slane %v1539, 4
        %v2242 = vrot.slane %v1984, 4
        %v2243 = vrot.slane %v1991, 4
        %vm2246 = vcmask 1043456
        %v2247 = vsel %vm2246, %v382, %v2224
        %v2248 = vsel %vm2246, %v389, %v2225
        %v2249 = vsel %vm2246, %v850, %v2230
        %v2250 = vsel %vm2246, %v857, %v2231
        %v2251 = vsel %vm2246, %v1302, %v2236
        %v2252 = vsel %vm2246, %v1309, %v2237
        %v2253 = vsel %vm2246, %v1746, %v2242
        %v2254 = vsel %vm2246, %v1753, %v2243
        %v2255 = vld [vmem:[%s1] sm:$0xff]
        %v2256 = vld [vmem:[%s2] sm:$0xff]
        %2258 = vset.pattern.permute.xlu0 0
        %2259 = vperm.xlu0 %2258, %v2256
        %v2260 = vpop.permute.xlu0 %2259
        %vm2262 = vcmask 293888
        %v2264 = vsel %vm2262, %v2255, 0
        %v2267 = vsel %vm2246, %v2214, 0
        %v2270 = vsel %vm2246, %v2221, 0
        %2272 = vmatprep.subr.mxu0 0.0
        %2273 = vmatpush1.msra.mxu0 0.0
        %2274 = vmatprep.subr.mxu0 0.0
        %2275 = vmatpush1.msra.mxu0 0.0
        %2276 = vmatprep.subr.mxu0 0.0
        %2277 = vmatpush1.msra.mxu0 0.0
        %2278 = vmatprep.subr.mxu0 0.0
        %2279 = vmatpush1.msra.mxu0 0.0
        %2280 = vmatprep.subr.mxu0 0.0
        %2281 = vmatpush1.msra.mxu0 0.0
        %2282 = vmatprep.subr.mxu0 0.0
        %2283 = vmatpush1.msra.mxu0 0.0
        %2284 = vmatprep.subr.mxu0 0.0
        %2285 = vmatpush1.msra.mxu0 0.0
        %2286 = vmatprep.subr.mxu0 0.0
        %2287 = vmatpush1.msra.mxu0 0.0
        %2288 = vmatprep.subr.mxu0 0.0
        %2289 = vmatpush1.msra.mxu0 0.0
        %2290 = vmatprep.subr.mxu0 0.0
        %2291 = vmatpush1.msra.mxu0 0.0
        %2292 = vmatprep.subr.mxu0 0.0
        %2293 = vmatpush1.msra.mxu0 0.0
        %2294 = vmatprep.subr.mxu0 %v2270
        %2295 = vmatpush1.msra.mxu0 %v2267
        %2296 = vmatprep.subr.mxu0 %v2254
        %2297 = vmatpush1.msra.mxu0 %v2253
        %2298 = vmatprep.subr.mxu0 %v2252
        %2299 = vmatpush1.msra.mxu0 %v2251
        %2300 = vmatprep.subr.mxu0 %v2250
        %2301 = vmatpush1.msra.mxu0 %v2249
        %2302 = vmatprep.subr.mxu0 %v2248
        %2303 = vmatpush1.msra.mxu0 %v2247
        %2304 = vmatprep.subr.mxu0 0.0
        %2305 = vmatpush2.msra.mxu0 0.0
        %2306 = vmatprep.subr.mxu0 0.0
        %2307 = vmatpush2.msra.mxu0 0.0
        %2308 = vmatprep.subr.mxu0 0.0
        %2309 = vmatpush2.msra.mxu0 0.0
        %2310 = vmatprep.subr.mxu0 0.0
        %2311 = vmatpush2.msra.mxu0 0.0
        %2312 = vmatprep.subr.mxu0 0.0
        %2313 = vmatpush2.msra.mxu0 0.0
        %2314 = vmatprep.subr.mxu0 0.0
        %2315 = vmatpush2.msra.mxu0 0.0
        %2316 = vmatprep.subr.mxu0 0.0
        %2317 = vmatpush2.msra.mxu0 0.0
        %2318 = vmatprep.subr.mxu0 0.0
        %2319 = vmatpush2.msra.mxu0 0.0
        %2320 = vmatprep.subr.mxu0 0.0
        %2321 = vmatpush2.msra.mxu0 0.0
        %2322 = vmatprep.subr.mxu0 0.0
        %2323 = vmatpush2.msra.mxu0 0.0
        %2324 = vmatprep.subr.mxu0 0.0
        %2325 = vmatpush2.msra.mxu0 0.0
        %2326 = vmatprep.subr.mxu0 0.0
        %2327 = vmatpush2.msra.mxu0 0.0
        %2328 = vmatprep.subr.mxu0 0.0
        %2329 = vmatpush2.msra.mxu0 0.0
        %2330 = vmatprep.subr.mxu0 0.0
        %2331 = vmatpush2.msra.mxu0 0.0
        %2332 = vmatprep.subr.mxu0 0.0
        %2333 = vmatpush2.msra.mxu0 0.0
        %2334 = vmatprep.subr.mxu0 0.0
        %2335 = vmatpush2.msra.mxu0 0.0
        %2336 = vmatprep.mubr.f32.mxu0 0.0
        %2337 = vmatmul.mubr.f32.gmra.mxu0 %v2264
        %v2338 = vpop.f32.mrf.mxu0
        %v2339 = vadd.f32 %v2260, %v2338
        %v2340 = vpop.f32.mrf.mxu0
        %v2341 = vadd.f32 %v2260, %v2340
        %2342 = vdwg.mxu0
        %2343 = vst [vmem:[%s163] sm:$0xff] %v2339
        %2344 = vst [vmem:[%s163 + $0x8] sm:$0xff] %v2341
        %s2345 = sand.u32 %s93, 1
        %s2346 = scalar_lea.sflag [#allocation3], %s2345
        %s2347 = sand.u32 %s93, 1
        %s2348 = smul.addr %s2347, 16
        %s2349 = scalar_lea.vmem [#allocation2], %s2348
        // Predicated region
        $region33: #{tpu_custom_call.1} parent=31 // pred_check
          %p2350 = pneg %p103
        $region34: #{tpu_custom_call.1} parent=31 // pred_check_branch
          %2352 = sbr.rel (%p2350) target = $region36
        $region35: #{tpu_custom_call.1} parent=31 // pred_region
          %s2354 = ssub.s32 256, 256
          %2355 = vsyncadd %s2346, %s2354
          %s2356 = smul.addr %s17, 2
          %s2357 = smul.addr %s2356, 128
          %s2358 = scalar_lea.hbm %s3, %s2357
          %s2360 = sshll.u32 %s2349, 4
          %s2361 = int_to_ptr.vmem [resolvable:$true] %s2360
          %2363 = dma.vmem_to_hbm [thread:$0]  %s2361, 256, %s2358, %s2346
        $region36: #{tpu_custom_call.1} parent=31 // pred_fallthru
          _
      $region32: #{tpu_custom_call.1} parent=5 // pred_fallthru
        _
      %p2364 = scmp.le.s32.totalorder 2, %s12
      // Predicated region
      $region37: #{tpu_custom_call.1} parent=5 // pred_check
        %p2365 = pneg %p2364
      $region38: #{tpu_custom_call.1} parent=5 // pred_check_branch
        %2367 = sbr.rel (%p2365) target = $region40
      $region39: #{tpu_custom_call.1} parent=5 // pred_region
        %s2368 = ssub.s32 %s12, 2
        // Predicated region
        $region41: #{tpu_custom_call.1} parent=39 // pred_check
          %p2369 = pneg %p109
        $region42: #{tpu_custom_call.1} parent=39 // pred_check_branch
          %2371 = sbr.rel (%p2369) target = $region44
        $region43: #{tpu_custom_call.1} parent=39 // pred_region
          %s2372 = sand.u32 %s94, 1
          %s2373 = scalar_lea.sflag [#allocation3], %s2372
          %s2374 = sand.u32 %s94, 1
          %s2375 = smul.addr %s2374, 16
          %s2376 = scalar_lea.vmem [#allocation2], %s2375
          %2377 = dma.done %s2373, 256
        $region44: #{tpu_custom_call.1} parent=39 // pred_fallthru
          _
      $region40: #{tpu_custom_call.1} parent=5 // pred_fallthru
        _
    $region6: #{tpu_custom_call.1} parent=1 // loop_footer
      %s16 = sadd.s32 1, %s12
    $region7: #{tpu_custom_call.1} parent=1 // loop_footer_branch
      %11 = sbr.rel target = $region3
    $region8: #{tpu_custom_call.1} parent=1 // loop_exit
      _
    %2378 = vsyncpa [#allocation3], 1
    %s2379 = scalar_lea.sflag [#allocation3], 1
    %2380 = vsyncpa %s2379, 1

</llo_original>
